<compile_context>
chip_gen: v7x
topology: tpu7x:2x2x1
jax: 0.10.0
libtpu: 0.0.40
codegen_flags: <defaults>
</compile_context>

<pallas_src>
import functools

import jax
import jax.numpy as jnp
from jax.experimental import pallas as pl
from jax.experimental.pallas import tpu as pltpu


_OUT_LANES = 128  # lane-dense output slab width


# ----------------------------------------------------------------------------
# Fused kernel: whole forward pass, everything resident in VMEM (all tensors tiny).
# ----------------------------------------------------------------------------
def _fused_forward_kernel(*refs, n_hist, n_hidden, n_head, head_widths):
    """refs layout (all VMEM whole-array blocks):
         xx_flat, xh,
         w_bb, b_bb,                  merged base+feature backbone projection
         (w, b) * n_hist,             histogram_layers (Linear + ReLU)
         wa_emb, wa_h, ba,            adaptor split by input rows (no concat needed)
         (w, b) * n_hidden,           shared hidden trunk (Linear + ReLU)
         (w, b) * n_head,             merged st/age/gender head chain
                                      (last entry = block-diag final, no ReLU,
                                       zero-padded to 128 output lanes)
         o_ref                        (Bp, 128) lane-dense output slab
    """
    it = iter(refs[:-1])
    o_ref = refs[-1]

    xx = next(it)[...]
    xh = next(it)[...]
    w_bb = next(it)[...]
    b_bb = next(it)[...]
    hist = [(next(it)[...], next(it)[...]) for _ in range(n_hist)]
    wa_emb = next(it)[...]
    wa_h = next(it)[...]
    ba = next(it)[...]
    hidden = [(next(it)[...], next(it)[...]) for _ in range(n_hidden)]
    head = [(next(it)[...], next(it)[...]) for _ in range(n_head)]

    f32 = jnp.float32

    # --- histogram branch: Linear + ReLU chain (histogram_dropout = identity) ---
    h = xh
    for w, b in hist:
        h = jnp.maximum(jnp.dot(h, w, preferred_element_type=f32) + b, 0.0)

    # --- both backbones as ONE merged projection over the shared image input ---
    emb = jnp.dot(xx, w_bb, preferred_element_type=f32) + b_bb

    # --- adaptor: concat([emb, h]) @ Wa  ==  emb @ Wa[:E] + h @ Wa[E:] ---
    xa = (jnp.dot(emb, wa_emb, preferred_element_type=f32)
          + jnp.dot(h, wa_h, preferred_element_type=f32) + ba)
    # embedding_dropout: identity in eval

    # --- shared hidden trunk ---
    z = xa
    for w, b in hidden:
        z = jnp.maximum(jnp.dot(z, w, preferred_element_type=f32) + b, 0.0)

    # --- merged heads: hidden layers (ReLU), then block-diagonal final (no act) ---
    y = z
    for w, b in head[:-1]:
        y = jnp.maximum(jnp.dot(y, w, preferred_element_type=f32) + b, 0.0)
    w_fin, b_fin = head[-1]
    logits = jnp.dot(y, w_fin, preferred_element_type=f32) + b_fin   # (Bp, 128)

    # --- per-segment (st / age / gender) softmax with lane masks; padding lanes
    #     stay exactly 0, so the single full-width store is unmasked + lane-dense ---
    lane = jax.lax.broadcasted_iota(jnp.int32, logits.shape, 1)
    out = jnp.zeros_like(logits)
    c = 0
    for nc in head_widths:
        mask = (lane >= c) & (lane < c + nc)
        m = jnp.max(jnp.where(mask, logits, -1e30), axis=-1, keepdims=True)
        e = jnp.where(mask, jnp.exp(logits - m), 0.0)
        s = jnp.sum(e, axis=-1, keepdims=True)
        out = out + e * pl.reciprocal(s, approx=True)
        c += nc
    o_ref[...] = out


# ----------------------------------------------------------------------------
# Deterministic parameter construction (shapes follow DualHistogramModel.__init__)
# ----------------------------------------------------------------------------
def _init_linear(key, din, dout):
    kw, kb = jax.random.split(key)
    bound = 1.0 / (din ** 0.5)
    w = jax.random.uniform(kw, (din, dout), jnp.float32, -bound, bound)
    b = jax.random.uniform(kb, (dout,), jnp.float32, -bound, bound)
    return w, b


def _block_diag(mats):
    rows = sum(m.shape[0] for m in mats)
    cols = sum(m.shape[1] for m in mats)
    out = jnp.zeros((rows, cols), jnp.float32)
    r = c = 0
    for m in mats:
        out = out.at[r:r + m.shape[0], c:c + m.shape[1]].set(m)
        r += m.shape[0]
        c += m.shape[1]
    return out


class DualHistogramModelPallas:
    N_CLASSES = (10, 4, 2)   # st / age / gender head widths

    def __init__(
        self,
        key,
        image_flat_dim,
        base_embed_dim=32,      # stands in for base_model.logits.in_features
        feat_embed_dim=32,      # stands in for feature_extractor.logits.in_features
        hidden_dims=(32,),
        st_dims=(32,),
        age_dims=(32,),
        gender_dims=(32,),
        histogram_dims=(10,),
        hist_in_dim=300,        # hardcoded in the PyTorch module
    ):
        assert len(st_dims) == len(age_dims) == len(gender_dims), (
            "head merging requires equal head depths")
        keys = iter(jax.random.split(key, 64))

        # synthetic backbones (see TODO(synk) at top); merged into one projection
        base_w, base_b = _init_linear(next(keys), image_flat_dim, base_embed_dim)
        feat_w, feat_b = _init_linear(next(keys), image_flat_dim, feat_embed_dim)
        self.w_bb = jnp.concatenate([base_w, feat_w], axis=1)
        self.b_bb = jnp.concatenate([base_b, feat_b])[None, :]
        emb_dim = base_embed_dim + feat_embed_dim

        # histogram_layers: Linear(300, d) + ReLU per dim
        self.hist_params = []
        cur = hist_in_dim
        for d in histogram_dims:
            w, b = _init_linear(next(keys), cur, d)
            self.hist_params.append((w, b[None, :]))
            cur = d
        hist_out = histogram_dims[-1]

        # adaptor Linear(emb_dim + hist_out, emb_dim), split by input rows so the
        # kernel computes partial sums instead of materializing a concatenate
        curr_dim = emb_dim + hist_out
        wa, ba = _init_linear(next(keys), curr_dim, curr_dim - hist_out)
        self.wa_emb = wa[:emb_dim]
        self.wa_h = wa[emb_dim:]
        self.ba = ba[None, :]
        curr_dim = curr_dim - hist_out

        # shared hidden trunk: Linear + ReLU per dim
        self.hidden_params = []
        for d in hidden_dims:
            w, b = _init_linear(next(keys), curr_dim, d)
            self.hidden_params.append((w, b[None, :]))
            curr_dim = d

        # per-head layers (built individually, then merged)
        def make_head(dims, n_classes):
            layers = []
            c = curr_dim
            for s in dims:
                layers.append(_init_linear(next(keys), c, s))
                c = s
            final = _init_linear(next(keys), c, n_classes)
            return layers, final

        st_hidden, st_final = make_head(st_dims, self.N_CLASSES[0])
        age_hidden, age_final = make_head(age_dims, self.N_CLASSES[1])
        gen_hidden, gen_final = make_head(gender_dims, self.N_CLASSES[2])

        # Merge heads: layer 0 shares the trunk input (concat along Dout); deeper
        # layers and the final are block-diagonal.  Final is zero-padded to 128
        # lanes so the kernel's single output store is lane-dense / unmasked.
        self.head_params = []
        n_head_hidden = len(st_dims)
        for i in range(n_head_hidden):
            ws = [st_hidden[i][0], age_hidden[i][0], gen_hidden[i][0]]
            bs = [st_hidden[i][1], age_hidden[i][1], gen_hidden[i][1]]
            w = jnp.concatenate(ws, axis=1) if i == 0 else _block_diag(ws)
            self.head_params.append((w, jnp.concatenate(bs)[None, :]))

        fin_ws = [st_final[0], age_final[0], gen_final[0]]
        fin_bs = [st_final[1], age_final[1], gen_final[1]]
        w_fin = (jnp.concatenate(fin_ws, axis=1) if n_head_hidden == 0
                 else _block_diag(fin_ws))
        b_fin = jnp.concatenate(fin_bs)
        n_out = sum(self.N_CLASSES)
        w_fin = jnp.pad(w_fin, ((0, 0), (0, _OUT_LANES - n_out)))
        b_fin = jnp.pad(b_fin, (0, _OUT_LANES - n_out))
        self.head_params.append((w_fin, b_fin[None, :]))

        self._jit_forward = jax.jit(self._forward_impl)

    # ----------------------------------------------------------------------
    def _forward_impl(self, xx, xh):
        B = xx.shape[0]
        xx_flat = xx.reshape(B, -1).astype(jnp.float32)   # NCHW flatten: C*H*W
        xh = xh.astype(jnp.float32)

        # pad batch to a full f32 sublane group (8 rows) -> full vreg occupancy
        Bp = ((B + 7) // 8) * 8
        xx_pad = jnp.pad(xx_flat, ((0, Bp - B), (0, 0)))
        xh_pad = jnp.pad(xh, ((0, Bp - B), (0, 0)))

        inputs = [xx_pad, xh_pad, self.w_bb, self.b_bb]
        for w, b in self.hist_params:
            inputs += [w, b]
        inputs += [self.wa_emb, self.wa_h, self.ba]
        for w, b in self.hidden_params:
            inputs += [w, b]
        for w, b in self.head_params:
            inputs += [w, b]

        kernel = functools.partial(
            _fused_forward_kernel,
            n_hist=len(self.hist_params),
            n_hidden=len(self.hidden_params),
            n_head=len(self.head_params),
            head_widths=self.N_CLASSES,
        )

        # Whole-array VMEM blocks: total weights+activations here are < 1 MiB.
        # TODO(synk): for a realistic Inception input (~76k features) the merged
        # backbone matmul should be K-tiled with a grid + accumulator instead of
        # a whole-array VMEM block (especially on v7x's 64 MiB VMEM).
        slab = pl.pallas_call(
            kernel,
            out_shape=jax.ShapeDtypeStruct((Bp, _OUT_LANES), jnp.float32),
            in_specs=[pl.BlockSpec(memory_space=pltpu.MemorySpace.VMEM)] * len(inputs),
            out_specs=pl.BlockSpec(memory_space=pltpu.MemorySpace.VMEM),
        )(*inputs)

        outs = []
        c = 0
        for nc in self.N_CLASSES:
            outs.append(slab[:B, c:c + nc])
            c += nc
        return outs

    def forward(self, x):
        xx, xh = x
        return self._jit_forward(xx, xh)


# ----------------------------------------------------------------------------
if __name__ == "__main__":
    key = jax.random.PRNGKey(0)
    k_img, k_hist, k_params = jax.random.split(key, 3)

    B, C, H, W = 2, 3, 16, 16
    xx = jax.random.normal(k_img, (B, C, H, W), jnp.float32)     # NCHW image
    xh = jax.random.uniform(k_hist, (B, 300), jnp.float32)       # 300-bin histogram

    model = DualHistogramModelPallas(k_params, image_flat_dim=C * H * W)

    outs = model.forward([xx, xh])
    outs = [jax.block_until_ready(o) for o in outs]

    assert outs[0].shape == (B, 10)
    assert outs[1].shape == (B, 4)
    assert outs[2].shape == (B, 2)
    for o in outs:
        assert bool(jnp.all(jnp.isfinite(o)))
        # softmax rows sum to 1 (approx reciprocal => ~1e-3 level tolerance)
        assert jnp.allclose(jnp.sum(o, axis=-1), 1.0, atol=5e-3)

    print("KERNEL_OK")
</pallas_src>

<mosaic_0001>
module attributes {stable_mosaic.version = 11 : i64} {
  func.func @_fused_forward_kernel(%arg0: memref<8x768xf32, #tpu.memory_space<vmem>>, %arg1: memref<8x300xf32, #tpu.memory_space<vmem>>, %arg2: memref<768x64xf32, #tpu.memory_space<vmem>>, %arg3: memref<1x64xf32, #tpu.memory_space<vmem>>, %arg4: memref<300x10xf32, #tpu.memory_space<vmem>>, %arg5: memref<1x10xf32, #tpu.memory_space<vmem>>, %arg6: memref<64x64xf32, #tpu.memory_space<vmem>>, %arg7: memref<10x64xf32, #tpu.memory_space<vmem>>, %arg8: memref<1x64xf32, #tpu.memory_space<vmem>>, %arg9: memref<64x32xf32, #tpu.memory_space<vmem>>, %arg10: memref<1x32xf32, #tpu.memory_space<vmem>>, %arg11: memref<32x96xf32, #tpu.memory_space<vmem>>, %arg12: memref<1x96xf32, #tpu.memory_space<vmem>>, %arg13: memref<96x128xf32, #tpu.memory_space<vmem>>, %arg14: memref<1x128xf32, #tpu.memory_space<vmem>>, %arg15: memref<8x128xf32, #tpu.memory_space<vmem>>) attributes {dimension_semantics = [], scalar_prefetch = 0 : i64, scratch_operands = 0 : i64, tpu.core_type = #tpu.core_type<tc>} {
    %c0 = arith.constant 0 : index
    %c0_0 = arith.constant 0 : index
    %0 = vector.load %arg0[%c0, %c0_0] : memref<8x768xf32, #tpu.memory_space<vmem>>, vector<8x768xf32>
    %c0_1 = arith.constant 0 : index
    %c0_2 = arith.constant 0 : index
    %1 = vector.load %arg1[%c0_1, %c0_2] : memref<8x300xf32, #tpu.memory_space<vmem>>, vector<8x300xf32>
    %c0_3 = arith.constant 0 : index
    %c0_4 = arith.constant 0 : index
    %2 = vector.load %arg2[%c0_3, %c0_4] : memref<768x64xf32, #tpu.memory_space<vmem>>, vector<768x64xf32>
    %c0_5 = arith.constant 0 : index
    %c0_6 = arith.constant 0 : index
    %3 = vector.load %arg3[%c0_5, %c0_6] : memref<1x64xf32, #tpu.memory_space<vmem>>, vector<1x64xf32>
    %c0_7 = arith.constant 0 : index
    %c0_8 = arith.constant 0 : index
    %4 = vector.load %arg4[%c0_7, %c0_8] : memref<300x10xf32, #tpu.memory_space<vmem>>, vector<300x10xf32>
    %c0_9 = arith.constant 0 : index
    %c0_10 = arith.constant 0 : index
    %5 = vector.load %arg5[%c0_9, %c0_10] : memref<1x10xf32, #tpu.memory_space<vmem>>, vector<1x10xf32>
    %c0_11 = arith.constant 0 : index
    %c0_12 = arith.constant 0 : index
    %6 = vector.load %arg6[%c0_11, %c0_12] : memref<64x64xf32, #tpu.memory_space<vmem>>, vector<64x64xf32>
    %c0_13 = arith.constant 0 : index
    %c0_14 = arith.constant 0 : index
    %7 = vector.load %arg7[%c0_13, %c0_14] : memref<10x64xf32, #tpu.memory_space<vmem>>, vector<10x64xf32>
    %c0_15 = arith.constant 0 : index
    %c0_16 = arith.constant 0 : index
    %8 = vector.load %arg8[%c0_15, %c0_16] : memref<1x64xf32, #tpu.memory_space<vmem>>, vector<1x64xf32>
    %c0_17 = arith.constant 0 : index
    %c0_18 = arith.constant 0 : index
    %9 = vector.load %arg9[%c0_17, %c0_18] : memref<64x32xf32, #tpu.memory_space<vmem>>, vector<64x32xf32>
    %c0_19 = arith.constant 0 : index
    %c0_20 = arith.constant 0 : index
    %10 = vector.load %arg10[%c0_19, %c0_20] : memref<1x32xf32, #tpu.memory_space<vmem>>, vector<1x32xf32>
    %c0_21 = arith.constant 0 : index
    %c0_22 = arith.constant 0 : index
    %11 = vector.load %arg11[%c0_21, %c0_22] : memref<32x96xf32, #tpu.memory_space<vmem>>, vector<32x96xf32>
    %c0_23 = arith.constant 0 : index
    %c0_24 = arith.constant 0 : index
    %12 = vector.load %arg12[%c0_23, %c0_24] : memref<1x96xf32, #tpu.memory_space<vmem>>, vector<1x96xf32>
    %c0_25 = arith.constant 0 : index
    %c0_26 = arith.constant 0 : index
    %13 = vector.load %arg13[%c0_25, %c0_26] : memref<96x128xf32, #tpu.memory_space<vmem>>, vector<96x128xf32>
    %c0_27 = arith.constant 0 : index
    %c0_28 = arith.constant 0 : index
    %14 = vector.load %arg14[%c0_27, %c0_28] : memref<1x128xf32, #tpu.memory_space<vmem>>, vector<1x128xf32>
    %cst = arith.constant dense<0.000000e+00> : vector<8x10xf32>
    %15 = tpu.matmul %1, %4, %cst {dimension_numbers = #tpu.dot_dimension_numbers<[1], [0], [0], [1], [0, 0, 1, 1], [], []>} : vector<8x300xf32>, vector<300x10xf32>, vector<8x10xf32> -> vector<8x10xf32>
    %16 = vector.broadcast %5 : vector<1x10xf32> to vector<8x10xf32>
    %17 = arith.addf %15, %16 : vector<8x10xf32>
    %cst_29 = arith.constant 0.000000e+00 : f32
    %18 = vector.broadcast %cst_29 : f32 to vector<8x10xf32>
    %19 = arith.maximumf %17, %18 : vector<8x10xf32>
    %cst_30 = arith.constant dense<0.000000e+00> : vector<8x64xf32>
    %20 = tpu.matmul %0, %2, %cst_30 {dimension_numbers = #tpu.dot_dimension_numbers<[1], [0], [0], [1], [0, 0, 1, 1], [], []>} : vector<8x768xf32>, vector<768x64xf32>, vector<8x64xf32> -> vector<8x64xf32>
    %21 = vector.broadcast %3 : vector<1x64xf32> to vector<8x64xf32>
    %22 = arith.addf %20, %21 : vector<8x64xf32>
    %cst_31 = arith.constant dense<0.000000e+00> : vector<8x64xf32>
    %23 = tpu.matmul %22, %6, %cst_31 {dimension_numbers = #tpu.dot_dimension_numbers<[1], [0], [0], [1], [0, 0, 1, 1], [], []>} : vector<8x64xf32>, vector<64x64xf32>, vector<8x64xf32> -> vector<8x64xf32>
    %cst_32 = arith.constant dense<0.000000e+00> : vector<8x64xf32>
    %24 = tpu.matmul %19, %7, %cst_32 {dimension_numbers = #tpu.dot_dimension_numbers<[1], [0], [0], [1], [0, 0, 1, 1], [], []>} : vector<8x10xf32>, vector<10x64xf32>, vector<8x64xf32> -> vector<8x64xf32>
    %25 = arith.addf %23, %24 : vector<8x64xf32>
    %26 = vector.broadcast %8 : vector<1x64xf32> to vector<8x64xf32>
    %27 = arith.addf %25, %26 : vector<8x64xf32>
    %cst_33 = arith.constant dense<0.000000e+00> : vector<8x32xf32>
    %28 = tpu.matmul %27, %9, %cst_33 {dimension_numbers = #tpu.dot_dimension_numbers<[1], [0], [0], [1], [0, 0, 1, 1], [], []>} : vector<8x64xf32>, vector<64x32xf32>, vector<8x32xf32> -> vector<8x32xf32>
    %29 = vector.broadcast %10 : vector<1x32xf32> to vector<8x32xf32>
    %30 = arith.addf %28, %29 : vector<8x32xf32>
    %cst_34 = arith.constant 0.000000e+00 : f32
    %31 = vector.broadcast %cst_34 : f32 to vector<8x32xf32>
    %32 = arith.maximumf %30, %31 : vector<8x32xf32>
    %cst_35 = arith.constant dense<0.000000e+00> : vector<8x96xf32>
    %33 = tpu.matmul %32, %11, %cst_35 {dimension_numbers = #tpu.dot_dimension_numbers<[1], [0], [0], [1], [0, 0, 1, 1], [], []>} : vector<8x32xf32>, vector<32x96xf32>, vector<8x96xf32> -> vector<8x96xf32>
    %34 = vector.broadcast %12 : vector<1x96xf32> to vector<8x96xf32>
    %35 = arith.addf %33, %34 : vector<8x96xf32>
    %cst_36 = arith.constant 0.000000e+00 : f32
    %36 = vector.broadcast %cst_36 : f32 to vector<8x96xf32>
    %37 = arith.maximumf %35, %36 : vector<8x96xf32>
    %cst_37 = arith.constant dense<0.000000e+00> : vector<8x128xf32>
    %38 = tpu.matmul %37, %13, %cst_37 {dimension_numbers = #tpu.dot_dimension_numbers<[1], [0], [0], [1], [0, 0, 1, 1], [], []>} : vector<8x96xf32>, vector<96x128xf32>, vector<8x128xf32> -> vector<8x128xf32>
    %39 = vector.broadcast %14 : vector<1x128xf32> to vector<8x128xf32>
    %40 = arith.addf %38, %39 : vector<8x128xf32>
    %41 = tpu.iota {dimensions = array<i32: 1>} : vector<8x128xi32>
    %cst_38 = arith.constant 0.000000e+00 : f32
    %42 = vector.broadcast %cst_38 : f32 to vector<8x128xf32>
    %c0_i32 = arith.constant 0 : i32
    %43 = vector.broadcast %c0_i32 : i32 to vector<8x128xi32>
    %44 = arith.cmpi sge, %41, %43 : vector<8x128xi32>
    %c10_i32 = arith.constant 10 : i32
    %45 = vector.broadcast %c10_i32 : i32 to vector<8x128xi32>
    %46 = arith.cmpi slt, %41, %45 : vector<8x128xi32>
    %47 = arith.andi %44, %46 : vector<8x128xi1>
    %cst_39 = arith.constant -1.000000e+30 : f32
    %48 = vector.broadcast %cst_39 : f32 to vector<8x128xf32>
    %49 = arith.select %47, %40, %48 : vector<8x128xi1>, vector<8x128xf32>
    %cst_40 = arith.constant dense<0xFF800000> : vector<8xf32>
    %50 = vector.multi_reduction <maximumf>, %49, %cst_40 [1] : vector<8x128xf32> to vector<8xf32>
    %51 = vector.shape_cast %50 : vector<8xf32> to vector<8x1xf32>
    %52 = vector.broadcast %51 : vector<8x1xf32> to vector<8x128xf32>
    %53 = arith.subf %40, %52 : vector<8x128xf32>
    %54 = math.exp %53 : vector<8x128xf32>
    %cst_41 = arith.constant 0.000000e+00 : f32
    %55 = vector.broadcast %cst_41 : f32 to vector<8x128xf32>
    %56 = arith.select %47, %54, %55 : vector<8x128xi1>, vector<8x128xf32>
    %cst_42 = arith.constant dense<0.000000e+00> : vector<8xf32>
    %57 = vector.multi_reduction <add>, %56, %cst_42 [1] : vector<8x128xf32> to vector<8xf32>
    %58 = vector.shape_cast %57 : vector<8xf32> to vector<8x1xf32>
    %59 = tpu.reciprocal %58 {approx = true} : vector<8x1xf32> -> vector<8x1xf32>
    %60 = vector.broadcast %59 : vector<8x1xf32> to vector<8x128xf32>
    %61 = arith.mulf %56, %60 : vector<8x128xf32>
    %62 = arith.addf %42, %61 : vector<8x128xf32>
    %c10_i32_43 = arith.constant 10 : i32
    %63 = vector.broadcast %c10_i32_43 : i32 to vector<8x128xi32>
    %64 = arith.cmpi sge, %41, %63 : vector<8x128xi32>
    %c14_i32 = arith.constant 14 : i32
    %65 = vector.broadcast %c14_i32 : i32 to vector<8x128xi32>
    %66 = arith.cmpi slt, %41, %65 : vector<8x128xi32>
    %67 = arith.andi %64, %66 : vector<8x128xi1>
    %cst_44 = arith.constant -1.000000e+30 : f32
    %68 = vector.broadcast %cst_44 : f32 to vector<8x128xf32>
    %69 = arith.select %67, %40, %68 : vector<8x128xi1>, vector<8x128xf32>
    %cst_45 = arith.constant dense<0xFF800000> : vector<8xf32>
    %70 = vector.multi_reduction <maximumf>, %69, %cst_45 [1] : vector<8x128xf32> to vector<8xf32>
    %71 = vector.shape_cast %70 : vector<8xf32> to vector<8x1xf32>
    %72 = vector.broadcast %71 : vector<8x1xf32> to vector<8x128xf32>
    %73 = arith.subf %40, %72 : vector<8x128xf32>
    %74 = math.exp %73 : vector<8x128xf32>
    %cst_46 = arith.constant 0.000000e+00 : f32
    %75 = vector.broadcast %cst_46 : f32 to vector<8x128xf32>
    %76 = arith.select %67, %74, %75 : vector<8x128xi1>, vector<8x128xf32>
    %cst_47 = arith.constant dense<0.000000e+00> : vector<8xf32>
    %77 = vector.multi_reduction <add>, %76, %cst_47 [1] : vector<8x128xf32> to vector<8xf32>
    %78 = vector.shape_cast %77 : vector<8xf32> to vector<8x1xf32>
    %79 = tpu.reciprocal %78 {approx = true} : vector<8x1xf32> -> vector<8x1xf32>
    %80 = vector.broadcast %79 : vector<8x1xf32> to vector<8x128xf32>
    %81 = arith.mulf %76, %80 : vector<8x128xf32>
    %82 = arith.addf %62, %81 : vector<8x128xf32>
    %c14_i32_48 = arith.constant 14 : i32
    %83 = vector.broadcast %c14_i32_48 : i32 to vector<8x128xi32>
    %84 = arith.cmpi sge, %41, %83 : vector<8x128xi32>
    %c16_i32 = arith.constant 16 : i32
    %85 = vector.broadcast %c16_i32 : i32 to vector<8x128xi32>
    %86 = arith.cmpi slt, %41, %85 : vector<8x128xi32>
    %87 = arith.andi %84, %86 : vector<8x128xi1>
    %cst_49 = arith.constant -1.000000e+30 : f32
    %88 = vector.broadcast %cst_49 : f32 to vector<8x128xf32>
    %89 = arith.select %87, %40, %88 : vector<8x128xi1>, vector<8x128xf32>
    %cst_50 = arith.constant dense<0xFF800000> : vector<8xf32>
    %90 = vector.multi_reduction <maximumf>, %89, %cst_50 [1] : vector<8x128xf32> to vector<8xf32>
    %91 = vector.shape_cast %90 : vector<8xf32> to vector<8x1xf32>
    %92 = vector.broadcast %91 : vector<8x1xf32> to vector<8x128xf32>
    %93 = arith.subf %40, %92 : vector<8x128xf32>
    %94 = math.exp %93 : vector<8x128xf32>
    %cst_51 = arith.constant 0.000000e+00 : f32
    %95 = vector.broadcast %cst_51 : f32 to vector<8x128xf32>
    %96 = arith.select %87, %94, %95 : vector<8x128xi1>, vector<8x128xf32>
    %cst_52 = arith.constant dense<0.000000e+00> : vector<8xf32>
    %97 = vector.multi_reduction <add>, %96, %cst_52 [1] : vector<8x128xf32> to vector<8xf32>
    %98 = vector.shape_cast %97 : vector<8xf32> to vector<8x1xf32>
    %99 = tpu.reciprocal %98 {approx = true} : vector<8x1xf32> -> vector<8x1xf32>
    %100 = vector.broadcast %99 : vector<8x1xf32> to vector<8x128xf32>
    %101 = arith.mulf %96, %100 : vector<8x128xf32>
    %102 = arith.addf %82, %101 : vector<8x128xf32>
    %c0_53 = arith.constant 0 : index
    %c0_54 = arith.constant 0 : index
    %103 = vector.load %arg15[%c0_53, %c0_54] : memref<8x128xf32, #tpu.memory_space<vmem>>, vector<8x128xf32>
    tpu.vector_store %arg15[%c0_53, %c0_54], %102 {strides = array<i32>} : memref<8x128xf32, #tpu.memory_space<vmem>>, vector<8x128xf32>,
    return
  }
}

</mosaic_0001>

<llo_original>
// kernel: _forward_impl.1
$region0: #{_forward_impl.1}
  #allocation0 [shape = 'u32[]', space=smem, size = 0x4, offset = 0x4, fixed_abs, tag = 'smem constant byte address 0x4 - core index']
  #allocation1 [shape = 'u32[144,128]{1,0:T(1,128)}', space=vmem, size = 0x12000, scoped, tag = 'internal scratch']
  %s0 = inlined_call_operand.vmem [shape: f32[8,768], index: 0, kind: input, shape index: {}]
  %s1 = inlined_call_operand.vmem [shape: f32[8,300], index: 1, kind: input, shape index: {}]
  %s2 = inlined_call_operand.hbm [shape: f32[768,64], index: 2, kind: input, shape index: {}]
  %s3 = inlined_call_operand.vmem [shape: f32[1,64], index: 3, kind: input, shape index: {}]
  %s4 = inlined_call_operand.hbm [shape: f32[300,10], index: 4, kind: input, shape index: {}]
  %s5 = inlined_call_operand.vmem [shape: f32[1,10], index: 5, kind: input, shape index: {}]
  %s6 = inlined_call_operand.vmem [shape: f32[64,64], index: 6, kind: input, shape index: {}]
  %s7 = inlined_call_operand.hbm [shape: f32[10,64], index: 7, kind: input, shape index: {}]
  %s8 = inlined_call_operand.vmem [shape: f32[1,64], index: 8, kind: input, shape index: {}]
  %s9 = inlined_call_operand.vmem [shape: f32[64,32], index: 9, kind: input, shape index: {}]
  %s10 = inlined_call_operand.hbm [shape: f32[1,32], index: 10, kind: input, shape index: {}]
  %s11 = inlined_call_operand.hbm [shape: f32[32,96], index: 11, kind: input, shape index: {}]
  %s12 = inlined_call_operand.hbm [shape: f32[1,96], index: 12, kind: input, shape index: {}]
  %s13 = inlined_call_operand.vmem [shape: f32[96,128], index: 13, kind: input, shape index: {}]
  %s14 = inlined_call_operand.hbm [shape: f32[1,128], index: 14, kind: input, shape index: {}]
  %s15 = inlined_call_operand.vmem [shape: f32[8,128], index: 15, kind: output, shape index: {}]
  %s16 = sld [smem:[#allocation0]]
  $region98: #{_forward_impl.1} parent=0
    _
  %s18 = ssub.s32 1, %s16
  %s19 = scalar_select 0, %s18, %s16
  $region1: #{_forward_impl.1} parent=0
    #allocation2 [shape = 'u8[393216]{0}', space=vmem, size = 0x60000, scoped, tag = 'input window, operand 2, single buffered']
    #allocation3 [shape = 's32[1]{0}', space=sflag, size = 0x4, scoped, tag = 'scoped memory for _forward_impl.1']
    #allocation4 [shape = 'u8[155648]{0}', space=vmem, size = 0x26000, scoped, tag = 'input window, operand 4, single buffered']
    #allocation5 [shape = 's32[1]{0}', space=sflag, size = 0x4, scoped, tag = 'scoped memory for _forward_impl.1']
    #allocation6 [shape = 'u8[8192]{0}', space=vmem, size = 0x2000, scoped, tag = 'input window, operand 7, single buffered']
    #allocation7 [shape = 'u8[512]{0}', space=vmem, size = 0x400, scoped, tag = 'input window, operand 10, single buffered']
    #allocation8 [shape = 's32[1]{0}', space=sflag, size = 0x4, scoped, tag = 'scoped memory for _forward_impl.1']
    #allocation9 [shape = 'u8[16384]{0}', space=vmem, size = 0x4000, scoped, tag = 'input window, operand 11, single buffered']
    #allocation10 [shape = 'u8[512]{0}', space=vmem, size = 0x400, scoped, tag = 'input window, operand 12, single buffered']
    #allocation11 [shape = 's32[1]{0}', space=sflag, size = 0x4, scoped, tag = 'scoped memory for _forward_impl.1']
    #allocation12 [shape = 'u8[512]{0}', space=vmem, size = 0x400, scoped, tag = 'input window, operand 14, single buffered']
    %20 = vsyncpa [#allocation3], 0
    %21 = vsyncpa [#allocation5], 0
    %22 = vsyncpa [#allocation8], 0
    %23 = vsyncpa [#allocation11], 0
    // Predicated region
    $region2: #{_forward_impl.1} parent=1 // pred_check
      _
    $region3: #{_forward_impl.1} parent=1 // pred_check_branch
      %25 = sbr.rel (0) target = $region5
    $region4: #{_forward_impl.1} parent=1 // pred_region
      _
    $region5: #{_forward_impl.1} parent=1 // pred_fallthru
      _
    // Predicated region
    $region6: #{_forward_impl.1} parent=1 // pred_check
      _
    $region7: #{_forward_impl.1} parent=1 // pred_check_branch
      %27 = sbr.rel (0) target = $region9
    $region8: #{_forward_impl.1} parent=1 // pred_region
      _
    $region9: #{_forward_impl.1} parent=1 // pred_fallthru
      _
    // Predicated region
    $region10: #{_forward_impl.1} parent=1 // pred_check
      _
    $region11: #{_forward_impl.1} parent=1 // pred_check_branch
      %29 = sbr.rel (0) target = $region13
    $region12: #{_forward_impl.1} parent=1 // pred_region
      %s31 = ssub.s32 12288, 12288
      %32 = vsyncadd [#allocation3], %s31
      %s33 = sshll.u32 [#allocation2], 4
      %s34 = int_to_ptr.vmem [resolvable:$true] %s33
      %39 = dma.hbm_to_vmem [thread:$0]  %s2, 12288, %s34, [#allocation3], 128, 128, 8
    $region13: #{_forward_impl.1} parent=1 // pred_fallthru
      _
    // Predicated region
    $region14: #{_forward_impl.1} parent=1 // pred_check
      _
    $region15: #{_forward_impl.1} parent=1 // pred_check_branch
      %41 = sbr.rel (0) target = $region17
    $region16: #{_forward_impl.1} parent=1 // pred_region
      _
    $region17: #{_forward_impl.1} parent=1 // pred_fallthru
      _
    // Predicated region
    $region18: #{_forward_impl.1} parent=1 // pred_check
      _
    $region19: #{_forward_impl.1} parent=1 // pred_check_branch
      %43 = sbr.rel (0) target = $region21
    $region20: #{_forward_impl.1} parent=1 // pred_region
      %s45 = ssub.s32 4864, 4864
      %46 = vsyncadd [#allocation5], %s45
      %s47 = sshll.u32 [#allocation4], 4
      %s48 = int_to_ptr.vmem [resolvable:$true] %s47
      %53 = dma.hbm_to_vmem [thread:$0]  %s4, 4864, %s48, [#allocation5], 128, 128, 8
    $region21: #{_forward_impl.1} parent=1 // pred_fallthru
      _
    // Predicated region
    $region22: #{_forward_impl.1} parent=1 // pred_check
      _
    $region23: #{_forward_impl.1} parent=1 // pred_check_branch
      %55 = sbr.rel (0) target = $region25
    $region24: #{_forward_impl.1} parent=1 // pred_region
      _
    $region25: #{_forward_impl.1} parent=1 // pred_fallthru
      _
    // Predicated region
    $region26: #{_forward_impl.1} parent=1 // pred_check
      _
    $region27: #{_forward_impl.1} parent=1 // pred_check_branch
      %57 = sbr.rel (0) target = $region29
    $region28: #{_forward_impl.1} parent=1 // pred_region
      _
    $region29: #{_forward_impl.1} parent=1 // pred_fallthru
      _
    // Predicated region
    $region30: #{_forward_impl.1} parent=1 // pred_check
      _
    $region31: #{_forward_impl.1} parent=1 // pred_check_branch
      %59 = sbr.rel (0) target = $region33
    $region32: #{_forward_impl.1} parent=1 // pred_region
      %s61 = ssub.s32 256, 256
      %62 = vsyncadd [#allocation5], %s61
      %s63 = sshll.u32 [#allocation6], 4
      %s64 = int_to_ptr.vmem [resolvable:$true] %s63
      %69 = dma.hbm_to_vmem [thread:$0]  %s7, 256, %s64, [#allocation5], 128, 128, 8
    $region33: #{_forward_impl.1} parent=1 // pred_fallthru
      _
    // Predicated region
    $region34: #{_forward_impl.1} parent=1 // pred_check
      _
    $region35: #{_forward_impl.1} parent=1 // pred_check_branch
      %71 = sbr.rel (0) target = $region37
    $region36: #{_forward_impl.1} parent=1 // pred_region
      _
    $region37: #{_forward_impl.1} parent=1 // pred_fallthru
      _
    // Predicated region
    $region38: #{_forward_impl.1} parent=1 // pred_check
      _
    $region39: #{_forward_impl.1} parent=1 // pred_check_branch
      %73 = sbr.rel (0) target = $region41
    $region40: #{_forward_impl.1} parent=1 // pred_region
      _
    $region41: #{_forward_impl.1} parent=1 // pred_fallthru
      _
    // Predicated region
    $region42: #{_forward_impl.1} parent=1 // pred_check
      _
    $region43: #{_forward_impl.1} parent=1 // pred_check_branch
      %75 = sbr.rel (0) target = $region45
    $region44: #{_forward_impl.1} parent=1 // pred_region
      %s77 = ssub.s32 16, 16
      %78 = vsyncadd [#allocation8], %s77
      %s80 = sshll.u32 [#allocation7], 4
      %s81 = int_to_ptr.vmem [resolvable:$true] %s80
      %83 = dma.hbm_to_vmem [thread:$0]  %s10, 16, %s81, [#allocation8]
    $region45: #{_forward_impl.1} parent=1 // pred_fallthru
      _
    // Predicated region
    $region46: #{_forward_impl.1} parent=1 // pred_check
      _
    $region47: #{_forward_impl.1} parent=1 // pred_check_branch
      %85 = sbr.rel (0) target = $region49
    $region48: #{_forward_impl.1} parent=1 // pred_region
      %s87 = ssub.s32 512, 512
      %88 = vsyncadd [#allocation8], %s87
      %s89 = sshll.u32 [#allocation9], 4
      %s90 = int_to_ptr.vmem [resolvable:$true] %s89
      %95 = dma.hbm_to_vmem [thread:$0]  %s11, 512, %s90, [#allocation8], 128, 128, 8
    $region49: #{_forward_impl.1} parent=1 // pred_fallthru
      _
    // Predicated region
    $region50: #{_forward_impl.1} parent=1 // pred_check
      _
    $region51: #{_forward_impl.1} parent=1 // pred_check_branch
      %97 = sbr.rel (0) target = $region53
    $region52: #{_forward_impl.1} parent=1 // pred_region
      %s99 = ssub.s32 16, 16
      %100 = vsyncadd [#allocation11], %s99
      %s102 = sshll.u32 [#allocation10], 4
      %s103 = int_to_ptr.vmem [resolvable:$true] %s102
      %105 = dma.hbm_to_vmem [thread:$0]  %s12, 16, %s103, [#allocation11]
    $region53: #{_forward_impl.1} parent=1 // pred_fallthru
      _
    // Predicated region
    $region54: #{_forward_impl.1} parent=1 // pred_check
      _
    $region55: #{_forward_impl.1} parent=1 // pred_check_branch
      %107 = sbr.rel (0) target = $region57
    $region56: #{_forward_impl.1} parent=1 // pred_region
      _
    $region57: #{_forward_impl.1} parent=1 // pred_fallthru
      _
    // Predicated region
    $region58: #{_forward_impl.1} parent=1 // pred_check
      _
    $region59: #{_forward_impl.1} parent=1 // pred_check_branch
      %109 = sbr.rel (0) target = $region61
    $region60: #{_forward_impl.1} parent=1 // pred_region
      %s111 = ssub.s32 16, 16
      %112 = vsyncadd [#allocation11], %s111
      %s114 = sshll.u32 [#allocation12], 4
      %s115 = int_to_ptr.vmem [resolvable:$true] %s114
      %117 = dma.hbm_to_vmem [thread:$0]  %s14, 16, %s115, [#allocation11]
    $region61: #{_forward_impl.1} parent=1 // pred_fallthru
      _
    // Predicated region
    $region62: #{_forward_impl.1} parent=1 // pred_check
      _
    $region63: #{_forward_impl.1} parent=1 // pred_check_branch
      %119 = sbr.rel (0) target = $region65
    $region64: #{_forward_impl.1} parent=1 // pred_region
      %120 = dma.done [#allocation3], 12288
    $region65: #{_forward_impl.1} parent=1 // pred_fallthru
      _
    // Predicated region
    $region66: #{_forward_impl.1} parent=1 // pred_check
      _
    $region67: #{_forward_impl.1} parent=1 // pred_check_branch
      %122 = sbr.rel (0) target = $region69
    $region68: #{_forward_impl.1} parent=1 // pred_region
      %123 = dma.done [#allocation5], 4864
    $region69: #{_forward_impl.1} parent=1 // pred_fallthru
      _
    // Predicated region
    $region70: #{_forward_impl.1} parent=1 // pred_check
      _
    $region71: #{_forward_impl.1} parent=1 // pred_check_branch
      %125 = sbr.rel (0) target = $region73
    $region72: #{_forward_impl.1} parent=1 // pred_region
      %126 = dma.done [#allocation5], 256
    $region73: #{_forward_impl.1} parent=1 // pred_fallthru
      _
    // Predicated region
    $region74: #{_forward_impl.1} parent=1 // pred_check
      _
    $region75: #{_forward_impl.1} parent=1 // pred_check_branch
      %128 = sbr.rel (0) target = $region77
    $region76: #{_forward_impl.1} parent=1 // pred_region
      %129 = dma.done [#allocation8], 16
    $region77: #{_forward_impl.1} parent=1 // pred_fallthru
      _
    // Predicated region
    $region78: #{_forward_impl.1} parent=1 // pred_check
      _
    $region79: #{_forward_impl.1} parent=1 // pred_check_branch
      %131 = sbr.rel (0) target = $region81
    $region80: #{_forward_impl.1} parent=1 // pred_region
      %132 = dma.done [#allocation8], 512
    $region81: #{_forward_impl.1} parent=1 // pred_fallthru
      _
    // Predicated region
    $region82: #{_forward_impl.1} parent=1 // pred_check
      _
    $region83: #{_forward_impl.1} parent=1 // pred_check_branch
      %134 = sbr.rel (0) target = $region85
    $region84: #{_forward_impl.1} parent=1 // pred_region
      %135 = dma.done [#allocation11], 16
    $region85: #{_forward_impl.1} parent=1 // pred_fallthru
      _
    // Predicated region
    $region86: #{_forward_impl.1} parent=1 // pred_check
      _
    $region87: #{_forward_impl.1} parent=1 // pred_check_branch
      %137 = sbr.rel (0) target = $region89
    $region88: #{_forward_impl.1} parent=1 // pred_region
      %138 = dma.done [#allocation11], 16
    $region89: #{_forward_impl.1} parent=1 // pred_fallthru
      _
    %v139 = vld [vmem:[%s0] sm:$0xff]
    %v140 = vld [vmem:[%s0 + $0x8] sm:$0xff]
    %v141 = vld [vmem:[%s0 + $0x10] sm:$0xff]
    %v142 = vld [vmem:[%s0 + $0x18] sm:$0xff]
    %v143 = vld [vmem:[%s0 + $0x20] sm:$0xff]
    %v144 = vld [vmem:[%s0 + $0x28] sm:$0xff]
    %v145 = vld [vmem:[%s1] sm:$0xff]
    %v146 = vld [vmem:[%s1 + $0x8] sm:$0xff]
    %v147 = vld [vmem:[%s1 + $0x10] sm:$0xff]
    %v148 = vld [vmem:[#allocation2] sm:$0xff]
    %v149 = vld [vmem:[#allocation2 + $0x8] sm:$0xff]
    %v150 = vld [vmem:[#allocation2 + $0x10] sm:$0xff]
    %v151 = vld [vmem:[#allocation2 + $0x18] sm:$0xff]
    %v152 = vld [vmem:[#allocation2 + $0x20] sm:$0xff]
    %v153 = vld [vmem:[#allocation2 + $0x28] sm:$0xff]
    %v154 = vld [vmem:[#allocation2 + $0x30] sm:$0xff]
    %v155 = vld [vmem:[#allocation2 + $0x38] sm:$0xff]
    %v156 = vld [vmem:[#allocation2 + $0x40] sm:$0xff]
    %v157 = vld [vmem:[#allocation2 + $0x48] sm:$0xff]
    %v158 = vld [vmem:[#allocation2 + $0x50] sm:$0xff]
    %v159 = vld [vmem:[#allocation2 + $0x58] sm:$0xff]
    %v160 = vld [vmem:[#allocation2 + $0x60] sm:$0xff]
    %v161 = vld [vmem:[#allocation2 + $0x68] sm:$0xff]
    %v162 = vld [vmem:[#allocation2 + $0x70] sm:$0xff]
    %v163 = vld [vmem:[#allocation2 + $0x78] sm:$0xff]
    %v164 = vld [vmem:[#allocation2 + $0x80] sm:$0xff]
    %v165 = vld [vmem:[#allocation2 + $0x88] sm:$0xff]
    %v166 = vld [vmem:[#allocation2 + $0x90] sm:$0xff]
    %v167 = vld [vmem:[#allocation2 + $0x98] sm:$0xff]
    %v168 = vld [vmem:[#allocation2 + $0xa0] sm:$0xff]
    %v169 = vld [vmem:[#allocation2 + $0xa8] sm:$0xff]
    %v170 = vld [vmem:[#allocation2 + $0xb0] sm:$0xff]
    %v171 = vld [vmem:[#allocation2 + $0xb8] sm:$0xff]
    %v172 = vld [vmem:[#allocation2 + $0xc0] sm:$0xff]
    %v173 = vld [vmem:[#allocation2 + $0xc8] sm:$0xff]
    %v174 = vld [vmem:[#allocation2 + $0xd0] sm:$0xff]
    %v175 = vld [vmem:[#allocation2 + $0xd8] sm:$0xff]
    %v176 = vld [vmem:[#allocation2 + $0xe0] sm:$0xff]
    %v177 = vld [vmem:[#allocation2 + $0xe8] sm:$0xff]
    %v178 = vld [vmem:[#allocation2 + $0xf0] sm:$0xff]
    %v179 = vld [vmem:[#allocation2 + $0xf8] sm:$0xff]
    %v180 = vld [vmem:[#allocation2 + $0x100] sm:$0xff]
    %v181 = vld [vmem:[#allocation2 + $0x108] sm:$0xff]
    %v182 = vld [vmem:[#allocation2 + $0x110] sm:$0xff]
    %v183 = vld [vmem:[#allocation2 + $0x118] sm:$0xff]
    %v184 = vld [vmem:[#allocation2 + $0x120] sm:$0xff]
    %v185 = vld [vmem:[#allocation2 + $0x128] sm:$0xff]
    %v186 = vld [vmem:[#allocation2 + $0x130] sm:$0xff]
    %v187 = vld [vmem:[#allocation2 + $0x138] sm:$0xff]
    %v188 = vld [vmem:[#allocation2 + $0x140] sm:$0xff]
    %v189 = vld [vmem:[#allocation2 + $0x148] sm:$0xff]
    %v190 = vld [vmem:[#allocation2 + $0x150] sm:$0xff]
    %v191 = vld [vmem:[#allocation2 + $0x158] sm:$0xff]
    %v192 = vld [vmem:[#allocation2 + $0x160] sm:$0xff]
    %v193 = vld [vmem:[#allocation2 + $0x168] sm:$0xff]
    %v194 = vld [vmem:[#allocation2 + $0x170] sm:$0xff]
    %v195 = vld [vmem:[#allocation2 + $0x178] sm:$0xff]
    %v196 = vld [vmem:[#allocation2 + $0x180] sm:$0xff]
    %v197 = vld [vmem:[#allocation2 + $0x188] sm:$0xff]
    %v198 = vld [vmem:[#allocation2 + $0x190] sm:$0xff]
    %v199 = vld [vmem:[#allocation2 + $0x198] sm:$0xff]
    %v200 = vld [vmem:[#allocation2 + $0x1a0] sm:$0xff]
    %v201 = vld [vmem:[#allocation2 + $0x1a8] sm:$0xff]
    %v202 = vld [vmem:[#allocation2 + $0x1b0] sm:$0xff]
    %v203 = vld [vmem:[#allocation2 + $0x1b8] sm:$0xff]
    %v204 = vld [vmem:[#allocation2 + $0x1c0] sm:$0xff]
    %v205 = vld [vmem:[#allocation2 + $0x1c8] sm:$0xff]
    %v206 = vld [vmem:[#allocation2 + $0x1d0] sm:$0xff]
    %v207 = vld [vmem:[#allocation2 + $0x1d8] sm:$0xff]
    %v208 = vld [vmem:[#allocation2 + $0x1e0] sm:$0xff]
    %v209 = vld [vmem:[#allocation2 + $0x1e8] sm:$0xff]
    %v210 = vld [vmem:[#allocation2 + $0x1f0] sm:$0xff]
    %v211 = vld [vmem:[#allocation2 + $0x1f8] sm:$0xff]
    %v212 = vld [vmem:[#allocation2 + $0x200] sm:$0xff]
    %v213 = vld [vmem:[#allocation2 + $0x208] sm:$0xff]
    %v214 = vld [vmem:[#allocation2 + $0x210] sm:$0xff]
    %v215 = vld [vmem:[#allocation2 + $0x218] sm:$0xff]
    %v216 = vld [vmem:[#allocation2 + $0x220] sm:$0xff]
    %v217 = vld [vmem:[#allocation2 + $0x228] sm:$0xff]
    %v218 = vld [vmem:[#allocation2 + $0x230] sm:$0xff]
    %v219 = vld [vmem:[#allocation2 + $0x238] sm:$0xff]
    %v220 = vld [vmem:[#allocation2 + $0x240] sm:$0xff]
    %v221 = vld [vmem:[#allocation2 + $0x248] sm:$0xff]
    %v222 = vld [vmem:[#allocation2 + $0x250] sm:$0xff]
    %v223 = vld [vmem:[#allocation2 + $0x258] sm:$0xff]
    %v224 = vld [vmem:[#allocation2 + $0x260] sm:$0xff]
    %v225 = vld [vmem:[#allocation2 + $0x268] sm:$0xff]
    %v226 = vld [vmem:[#allocation2 + $0x270] sm:$0xff]
    %v227 = vld [vmem:[#allocation2 + $0x278] sm:$0xff]
    %v228 = vld [vmem:[#allocation2 + $0x280] sm:$0xff]
    %v229 = vld [vmem:[#allocation2 + $0x288] sm:$0xff]
    %v230 = vld [vmem:[#allocation2 + $0x290] sm:$0xff]
    %v231 = vld [vmem:[#allocation2 + $0x298] sm:$0xff]
    %v232 = vld [vmem:[#allocation2 + $0x2a0] sm:$0xff]
    %v233 = vld [vmem:[#allocation2 + $0x2a8] sm:$0xff]
    %v234 = vld [vmem:[#allocation2 + $0x2b0] sm:$0xff]
    %v235 = vld [vmem:[#allocation2 + $0x2b8] sm:$0xff]
    %v236 = vld [vmem:[#allocation2 + $0x2c0] sm:$0xff]
    %v237 = vld [vmem:[#allocation2 + $0x2c8] sm:$0xff]
    %v238 = vld [vmem:[#allocation2 + $0x2d0] sm:$0xff]
    %v239 = vld [vmem:[#allocation2 + $0x2d8] sm:$0xff]
    %v240 = vld [vmem:[#allocation2 + $0x2e0] sm:$0xff]
    %v241 = vld [vmem:[#allocation2 + $0x2e8] sm:$0xff]
    %v242 = vld [vmem:[#allocation2 + $0x2f0] sm:$0xff]
    %v243 = vld [vmem:[#allocation2 + $0x2f8] sm:$0xff]
    %v244 = vld [vmem:[%s3] sm:$0x1]
    %v245 = vld [vmem:[#allocation4] sm:$0xff]
    %v246 = vld [vmem:[#allocation4 + $0x8] sm:$0xff]
    %v247 = vld [vmem:[#allocation4 + $0x10] sm:$0xff]
    %v248 = vld [vmem:[#allocation4 + $0x18] sm:$0xff]
    %v249 = vld [vmem:[#allocation4 + $0x20] sm:$0xff]
    %v250 = vld [vmem:[#allocation4 + $0x28] sm:$0xff]
    %v251 = vld [vmem:[#allocation4 + $0x30] sm:$0xff]
    %v252 = vld [vmem:[#allocation4 + $0x38] sm:$0xff]
    %v253 = vld [vmem:[#allocation4 + $0x40] sm:$0xff]
    %v254 = vld [vmem:[#allocation4 + $0x48] sm:$0xff]
    %v255 = vld [vmem:[#allocation4 + $0x50] sm:$0xff]
    %v256 = vld [vmem:[#allocation4 + $0x58] sm:$0xff]
    %v257 = vld [vmem:[#allocation4 + $0x60] sm:$0xff]
    %v258 = vld [vmem:[#allocation4 + $0x68] sm:$0xff]
    %v259 = vld [vmem:[#allocation4 + $0x70] sm:$0xff]
    %v260 = vld [vmem:[#allocation4 + $0x78] sm:$0xff]
    %v261 = vld [vmem:[#allocation4 + $0x80] sm:$0xff]
    %v262 = vld [vmem:[#allocation4 + $0x88] sm:$0xff]
    %v263 = vld [vmem:[#allocation4 + $0x90] sm:$0xff]
    %v264 = vld [vmem:[#allocation4 + $0x98] sm:$0xff]
    %v265 = vld [vmem:[#allocation4 + $0xa0] sm:$0xff]
    %v266 = vld [vmem:[#allocation4 + $0xa8] sm:$0xff]
    %v267 = vld [vmem:[#allocation4 + $0xb0] sm:$0xff]
    %v268 = vld [vmem:[#allocation4 + $0xb8] sm:$0xff]
    %v269 = vld [vmem:[#allocation4 + $0xc0] sm:$0xff]
    %v270 = vld [vmem:[#allocation4 + $0xc8] sm:$0xff]
    %v271 = vld [vmem:[#allocation4 + $0xd0] sm:$0xff]
    %v272 = vld [vmem:[#allocation4 + $0xd8] sm:$0xff]
    %v273 = vld [vmem:[#allocation4 + $0xe0] sm:$0xff]
    %v274 = vld [vmem:[#allocation4 + $0xe8] sm:$0xff]
    %v275 = vld [vmem:[#allocation4 + $0xf0] sm:$0xff]
    %v276 = vld [vmem:[#allocation4 + $0xf8] sm:$0xff]
    %v277 = vld [vmem:[#allocation4 + $0x100] sm:$0xff]
    %v278 = vld [vmem:[#allocation4 + $0x108] sm:$0xff]
    %v279 = vld [vmem:[#allocation4 + $0x110] sm:$0xff]
    %v280 = vld [vmem:[#allocation4 + $0x118] sm:$0xff]
    %v281 = vld [vmem:[#allocation4 + $0x120] sm:$0xff]
    %v282 = vld [vmem:[#allocation4 + $0x128] sm:$0xf]
    %v283 = vld [vmem:[%s5] sm:$0x1]
    %v284 = vld [vmem:[%s6] sm:$0xff]
    %v285 = vld [vmem:[%s6 + $0x8] sm:$0xff]
    %v286 = vld [vmem:[%s6 + $0x10] sm:$0xff]
    %v287 = vld [vmem:[%s6 + $0x18] sm:$0xff]
    %v288 = vld [vmem:[%s6 + $0x20] sm:$0xff]
    %v289 = vld [vmem:[%s6 + $0x28] sm:$0xff]
    %v290 = vld [vmem:[%s6 + $0x30] sm:$0xff]
    %v291 = vld [vmem:[%s6 + $0x38] sm:$0xff]
    %v292 = vld [vmem:[#allocation6] sm:$0xff]
    %v293 = vld [vmem:[#allocation6 + $0x8] sm:$0x3]
    %v294 = vld [vmem:[%s8] sm:$0x1]
    %v295 = vld [vmem:[%s9] sm:$0xff]
    %v296 = vld [vmem:[%s9 + $0x8] sm:$0xff]
    %v297 = vld [vmem:[%s9 + $0x10] sm:$0xff]
    %v298 = vld [vmem:[%s9 + $0x18] sm:$0xff]
    %v299 = vld [vmem:[%s9 + $0x20] sm:$0xff]
    %v300 = vld [vmem:[%s9 + $0x28] sm:$0xff]
    %v301 = vld [vmem:[%s9 + $0x30] sm:$0xff]
    %v302 = vld [vmem:[%s9 + $0x38] sm:$0xff]
    %v303 = vld [vmem:[#allocation7] sm:$0x1]
    %v304 = vld [vmem:[#allocation9] sm:$0xff]
    %v305 = vld [vmem:[#allocation9 + $0x8] sm:$0xff]
    %v306 = vld [vmem:[#allocation9 + $0x10] sm:$0xff]
    %v307 = vld [vmem:[#allocation9 + $0x18] sm:$0xff]
    %v308 = vld [vmem:[#allocation10] sm:$0x1]
    %v309 = vld [vmem:[%s13] sm:$0xff]
    %v310 = vld [vmem:[%s13 + $0x8] sm:$0xff]
    %v311 = vld [vmem:[%s13 + $0x10] sm:$0xff]
    %v312 = vld [vmem:[%s13 + $0x18] sm:$0xff]
    %v313 = vld [vmem:[%s13 + $0x20] sm:$0xff]
    %v314 = vld [vmem:[%s13 + $0x28] sm:$0xff]
    %v315 = vld [vmem:[%s13 + $0x30] sm:$0xff]
    %v316 = vld [vmem:[%s13 + $0x38] sm:$0xff]
    %v317 = vld [vmem:[%s13 + $0x40] sm:$0xff]
    %v318 = vld [vmem:[%s13 + $0x48] sm:$0xff]
    %v319 = vld [vmem:[%s13 + $0x50] sm:$0xff]
    %v320 = vld [vmem:[%s13 + $0x58] sm:$0xff]
    %v321 = vld [vmem:[#allocation12] sm:$0x1]
    %v323 = vlaneseq
    %v324 = vshrl.u32 %v323, 7
    %v325 = vsub.s32 0, %v324
    %v326 = vrot.slane %v283, %v325
    %vm328 = vcmask 359424
    %v330 = vsel %vm328, %v147, 0
    %vm332 = vcmask 1043456
    %v334 = vsel %vm332, %v282, 0
    %336 = vmatprep.subr.mxu0 0.0
    %337 = vmatpush1.msra.mxu0 %v245
    %338 = vmatprep.subr.mxu0 0.0
    %339 = vmatpush1.msra.mxu0 %v246
    %340 = vmatprep.subr.mxu0 0.0
    %341 = vmatpush1.msra.mxu0 %v247
    %342 = vmatprep.subr.mxu0 0.0
    %343 = vmatpush1.msra.mxu0 %v248
    %344 = vmatprep.subr.mxu0 0.0
    %345 = vmatpush1.msra.mxu0 %v249
    %346 = vmatprep.subr.mxu0 0.0
    %347 = vmatpush1.msra.mxu0 %v250
    %348 = vmatprep.subr.mxu0 0.0
    %349 = vmatpush1.msra.mxu0 %v251
    %350 = vmatprep.subr.mxu0 0.0
    %351 = vmatpush1.msra.mxu0 %v252
    %352 = vmatprep.subr.mxu0 0.0
    %353 = vmatpush1.msra.mxu0 %v253
    %354 = vmatprep.subr.mxu0 0.0
    %355 = vmatpush1.msra.mxu0 %v254
    %356 = vmatprep.subr.mxu0 0.0
    %357 = vmatpush1.msra.mxu0 %v255
    %358 = vmatprep.subr.mxu0 0.0
    %359 = vmatpush1.msra.mxu0 %v256
    %360 = vmatprep.subr.mxu0 0.0
    %361 = vmatpush1.msra.mxu0 %v257
    %362 = vmatprep.subr.mxu0 0.0
    %363 = vmatpush1.msra.mxu0 %v258
    %364 = vmatprep.subr.mxu0 0.0
    %365 = vmatpush1.msra.mxu0 %v259
    %366 = vmatprep.subr.mxu0 0.0
    %367 = vmatpush1.msra.mxu0 %v260
    %368 = vmatprep.subr.mxu0 0.0
    %369 = vmatpush1.msra.mxu0 %v261
    %370 = vmatprep.subr.mxu0 0.0
    %371 = vmatpush1.msra.mxu0 %v262
    %372 = vmatprep.subr.mxu0 0.0
    %373 = vmatpush1.msra.mxu0 %v263
    %374 = vmatprep.subr.mxu0 0.0
    %375 = vmatpush1.msra.mxu0 %v264
    %376 = vmatprep.subr.mxu0 0.0
    %377 = vmatpush1.msra.mxu0 %v265
    %378 = vmatprep.subr.mxu0 0.0
    %379 = vmatpush1.msra.mxu0 %v266
    %380 = vmatprep.subr.mxu0 0.0
    %381 = vmatpush1.msra.mxu0 %v267
    %382 = vmatprep.subr.mxu0 0.0
    %383 = vmatpush1.msra.mxu0 %v268
    %384 = vmatprep.subr.mxu0 0.0
    %385 = vmatpush1.msra.mxu0 %v269
    %386 = vmatprep.subr.mxu0 0.0
    %387 = vmatpush1.msra.mxu0 %v270
    %388 = vmatprep.subr.mxu0 0.0
    %389 = vmatpush1.msra.mxu0 %v271
    %390 = vmatprep.subr.mxu0 0.0
    %391 = vmatpush1.msra.mxu0 %v272
    %392 = vmatprep.subr.mxu0 0.0
    %393 = vmatpush1.msra.mxu0 %v273
    %394 = vmatprep.subr.mxu0 0.0
    %395 = vmatpush1.msra.mxu0 %v274
    %396 = vmatprep.subr.mxu0 0.0
    %397 = vmatpush1.msra.mxu0 %v275
    %398 = vmatprep.subr.mxu0 0.0
    %399 = vmatpush1.msra.mxu0 %v276
    %400 = vmatprep.mubr.f32.mxu0 %v146
    %401 = vmatmul.mubr.f32.gmra.mrb[0].mxu0 %v145
    %v402 = vpop.f32.mrb[0].mxu0
    %v403 = vadd.f32 %v326, %v402
    %v404 = vpop.f32.mrb[0].mxu0
    %405 = vdwg.mxu0
    %406 = vmatprep.subr.mxu0 0.0
    %407 = vmatpush1.msra.mxu0 %v277
    %408 = vmatprep.subr.mxu0 0.0
    %409 = vmatpush1.msra.mxu0 %v278
    %410 = vmatprep.subr.mxu0 0.0
    %411 = vmatpush1.msra.mxu0 %v279
    %412 = vmatprep.subr.mxu0 0.0
    %413 = vmatpush1.msra.mxu0 %v280
    %414 = vmatprep.subr.mxu0 0.0
    %415 = vmatpush1.msra.mxu0 %v281
    %416 = vmatprep.subr.mxu0 0.0
    %417 = vmatpush1.msra.mxu0 %v334
    %418 = vmatprep.subr.mxu0 0.0
    %419 = vmatpush1.msra.mxu0 0.0
    %420 = vmatprep.subr.mxu0 0.0
    %421 = vmatpush1.msra.mxu0 0.0
    %422 = vmatprep.subr.mxu0 0.0
    %423 = vmatpush1.msra.mxu0 0.0
    %424 = vmatprep.subr.mxu0 0.0
    %425 = vmatpush1.msra.mxu0 0.0
    %426 = vmatprep.subr.mxu0 0.0
    %427 = vmatpush1.msra.mxu0 0.0
    %428 = vmatprep.subr.mxu0 0.0
    %429 = vmatpush1.msra.mxu0 0.0
    %430 = vmatprep.subr.mxu0 0.0
    %431 = vmatpush1.msra.mxu0 0.0
    %432 = vmatprep.subr.mxu0 0.0
    %433 = vmatpush1.msra.mxu0 0.0
    %434 = vmatprep.subr.mxu0 0.0
    %435 = vmatpush1.msra.mxu0 0.0
    %436 = vmatprep.subr.mxu0 0.0
    %437 = vmatpush1.msra.mxu0 0.0
    %438 = vmatprep.subr.mxu0 0.0
    %439 = vmatpush1.msra.mxu0 0.0
    %440 = vmatprep.subr.mxu0 0.0
    %441 = vmatpush1.msra.mxu0 0.0
    %442 = vmatprep.subr.mxu0 0.0
    %443 = vmatpush1.msra.mxu0 0.0
    %444 = vmatprep.subr.mxu0 0.0
    %445 = vmatpush1.msra.mxu0 0.0
    %446 = vmatprep.subr.mxu0 0.0
    %447 = vmatpush1.msra.mxu0 0.0
    %448 = vmatprep.subr.mxu0 0.0
    %449 = vmatpush1.msra.mxu0 0.0
    %450 = vmatprep.subr.mxu0 0.0
    %451 = vmatpush1.msra.mxu0 0.0
    %452 = vmatprep.subr.mxu0 0.0
    %453 = vmatpush1.msra.mxu0 0.0
    %454 = vmatprep.subr.mxu0 0.0
    %455 = vmatpush1.msra.mxu0 0.0
    %456 = vmatprep.subr.mxu0 0.0
    %457 = vmatpush1.msra.mxu0 0.0
    %458 = vmatprep.subr.mxu0 0.0
    %459 = vmatpush1.msra.mxu0 0.0
    %460 = vmatprep.subr.mxu0 0.0
    %461 = vmatpush1.msra.mxu0 0.0
    %462 = vmatprep.subr.mxu0 0.0
    %463 = vmatpush1.msra.mxu0 0.0
    %464 = vmatprep.subr.mxu0 0.0
    %465 = vmatpush1.msra.mxu0 0.0
    %466 = vmatprep.subr.mxu0 0.0
    %467 = vmatpush1.msra.mxu0 0.0
    %468 = vmatprep.subr.mxu0 0.0
    %469 = vmatpush1.msra.mxu0 0.0
    %470 = vmatprep.mubr.f32.mxu0 0.0
    %471 = vmatmul.mubr.f32.gmra.mrb[0].mxu0 %v330
    %v472 = vpop.f32.mrb[0].mxu0
    %v473 = vadd.f32 %v403, %v472
    %v474 = vpop.f32.mrb[0].mxu0
    %475 = vdwg.mxu0
    %v476 = vmax.f32 %v473, 0.0
    %v478 = vlaneseq
    %v479 = vshrl.u32 %v478, 7
    %v480 = vsub.s32 0, %v479
    %v481 = vrot.slane %v244, %v480
    %483 = vmatprep.subr.mxu0 0.0
    %484 = vmatpush1.msra.mxu0 %v148
    %485 = vmatprep.subr.mxu0 0.0
    %486 = vmatpush1.msra.mxu0 %v149
    %487 = vmatprep.subr.mxu0 0.0
    %488 = vmatpush1.msra.mxu0 %v150
    %489 = vmatprep.subr.mxu0 0.0
    %490 = vmatpush1.msra.mxu0 %v151
    %491 = vmatprep.subr.mxu0 0.0
    %492 = vmatpush1.msra.mxu0 %v152
    %493 = vmatprep.subr.mxu0 0.0
    %494 = vmatpush1.msra.mxu0 %v153
    %495 = vmatprep.subr.mxu0 0.0
    %496 = vmatpush1.msra.mxu0 %v154
    %497 = vmatprep.subr.mxu0 0.0
    %498 = vmatpush1.msra.mxu0 %v155
    %499 = vmatprep.subr.mxu0 0.0
    %500 = vmatpush1.msra.mxu0 %v156
    %501 = vmatprep.subr.mxu0 0.0
    %502 = vmatpush1.msra.mxu0 %v157
    %503 = vmatprep.subr.mxu0 0.0
    %504 = vmatpush1.msra.mxu0 %v158
    %505 = vmatprep.subr.mxu0 0.0
    %506 = vmatpush1.msra.mxu0 %v159
    %507 = vmatprep.subr.mxu0 0.0
    %508 = vmatpush1.msra.mxu0 %v160
    %509 = vmatprep.subr.mxu0 0.0
    %510 = vmatpush1.msra.mxu0 %v161
    %511 = vmatprep.subr.mxu0 0.0
    %512 = vmatpush1.msra.mxu0 %v162
    %513 = vmatprep.subr.mxu0 0.0
    %514 = vmatpush1.msra.mxu0 %v163
    %515 = vmatprep.subr.mxu0 0.0
    %516 = vmatpush1.msra.mxu0 %v164
    %517 = vmatprep.subr.mxu0 0.0
    %518 = vmatpush1.msra.mxu0 %v165
    %519 = vmatprep.subr.mxu0 0.0
    %520 = vmatpush1.msra.mxu0 %v166
    %521 = vmatprep.subr.mxu0 0.0
    %522 = vmatpush1.msra.mxu0 %v167
    %523 = vmatprep.subr.mxu0 0.0
    %524 = vmatpush1.msra.mxu0 %v168
    %525 = vmatprep.subr.mxu0 0.0
    %526 = vmatpush1.msra.mxu0 %v169
    %527 = vmatprep.subr.mxu0 0.0
    %528 = vmatpush1.msra.mxu0 %v170
    %529 = vmatprep.subr.mxu0 0.0
    %530 = vmatpush1.msra.mxu0 %v171
    %531 = vmatprep.subr.mxu0 0.0
    %532 = vmatpush1.msra.mxu0 %v172
    %533 = vmatprep.subr.mxu0 0.0
    %534 = vmatpush1.msra.mxu0 %v173
    %535 = vmatprep.subr.mxu0 0.0
    %536 = vmatpush1.msra.mxu0 %v174
    %537 = vmatprep.subr.mxu0 0.0
    %538 = vmatpush1.msra.mxu0 %v175
    %539 = vmatprep.subr.mxu0 0.0
    %540 = vmatpush1.msra.mxu0 %v176
    %541 = vmatprep.subr.mxu0 0.0
    %542 = vmatpush1.msra.mxu0 %v177
    %543 = vmatprep.subr.mxu0 0.0
    %544 = vmatpush1.msra.mxu0 %v178
    %545 = vmatprep.subr.mxu0 0.0
    %546 = vmatpush1.msra.mxu0 %v179
    %547 = vmatprep.mubr.f32.mxu0 %v140
    %548 = vmatmul.mubr.f32.gmra.mrb[0].mxu0 %v139
    %v549 = vpop.f32.mrb[0].mxu0
    %v550 = vadd.f32 %v481, %v549
    %v551 = vpop.f32.mrb[0].mxu0
    %552 = vdwg.mxu0
    %553 = vmatprep.subr.mxu0 0.0
    %554 = vmatpush1.msra.mxu0 %v180
    %555 = vmatprep.subr.mxu0 0.0
    %556 = vmatpush1.msra.mxu0 %v181
    %557 = vmatprep.subr.mxu0 0.0
    %558 = vmatpush1.msra.mxu0 %v182
    %559 = vmatprep.subr.mxu0 0.0
    %560 = vmatpush1.msra.mxu0 %v183
    %561 = vmatprep.subr.mxu0 0.0
    %562 = vmatpush1.msra.mxu0 %v184
    %563 = vmatprep.subr.mxu0 0.0
    %564 = vmatpush1.msra.mxu0 %v185
    %565 = vmatprep.subr.mxu0 0.0
    %566 = vmatpush1.msra.mxu0 %v186
    %567 = vmatprep.subr.mxu0 0.0
    %568 = vmatpush1.msra.mxu0 %v187
    %569 = vmatprep.subr.mxu0 0.0
    %570 = vmatpush1.msra.mxu0 %v188
    %571 = vmatprep.subr.mxu0 0.0
    %572 = vmatpush1.msra.mxu0 %v189
    %573 = vmatprep.subr.mxu0 0.0
    %574 = vmatpush1.msra.mxu0 %v190
    %575 = vmatprep.subr.mxu0 0.0
    %576 = vmatpush1.msra.mxu0 %v191
    %577 = vmatprep.subr.mxu0 0.0
    %578 = vmatpush1.msra.mxu0 %v192
    %579 = vmatprep.subr.mxu0 0.0
    %580 = vmatpush1.msra.mxu0 %v193
    %581 = vmatprep.subr.mxu0 0.0
    %582 = vmatpush1.msra.mxu0 %v194
    %583 = vmatprep.subr.mxu0 0.0
    %584 = vmatpush1.msra.mxu0 %v195
    %585 = vmatprep.subr.mxu0 0.0
    %586 = vmatpush1.msra.mxu0 %v196
    %587 = vmatprep.subr.mxu0 0.0
    %588 = vmatpush1.msra.mxu0 %v197
    %589 = vmatprep.subr.mxu0 0.0
    %590 = vmatpush1.msra.mxu0 %v198
    %591 = vmatprep.subr.mxu0 0.0
    %592 = vmatpush1.msra.mxu0 %v199
    %593 = vmatprep.subr.mxu0 0.0
    %594 = vmatpush1.msra.mxu0 %v200
    %595 = vmatprep.subr.mxu0 0.0
    %596 = vmatpush1.msra.mxu0 %v201
    %597 = vmatprep.subr.mxu0 0.0
    %598 = vmatpush1.msra.mxu0 %v202
    %599 = vmatprep.subr.mxu0 0.0
    %600 = vmatpush1.msra.mxu0 %v203
    %601 = vmatprep.subr.mxu0 0.0
    %602 = vmatpush1.msra.mxu0 %v204
    %603 = vmatprep.subr.mxu0 0.0
    %604 = vmatpush1.msra.mxu0 %v205
    %605 = vmatprep.subr.mxu0 0.0
    %606 = vmatpush1.msra.mxu0 %v206
    %607 = vmatprep.subr.mxu0 0.0
    %608 = vmatpush1.msra.mxu0 %v207
    %609 = vmatprep.subr.mxu0 0.0
    %610 = vmatpush1.msra.mxu0 %v208
    %611 = vmatprep.subr.mxu0 0.0
    %612 = vmatpush1.msra.mxu0 %v209
    %613 = vmatprep.subr.mxu0 0.0
    %614 = vmatpush1.msra.mxu0 %v210
    %615 = vmatprep.subr.mxu0 0.0
    %616 = vmatpush1.msra.mxu0 %v211
    %617 = vmatprep.mubr.f32.mxu0 %v142
    %618 = vmatmul.mubr.f32.gmra.mrb[0].mxu0 %v141
    %v619 = vpop.f32.mrb[0].mxu0
    %v620 = vadd.f32 %v550, %v619
    %v621 = vpop.f32.mrb[0].mxu0
    %622 = vdwg.mxu0
    %623 = vmatprep.subr.mxu0 0.0
    %624 = vmatpush1.msra.mxu0 %v212
    %625 = vmatprep.subr.mxu0 0.0
    %626 = vmatpush1.msra.mxu0 %v213
    %627 = vmatprep.subr.mxu0 0.0
    %628 = vmatpush1.msra.mxu0 %v214
    %629 = vmatprep.subr.mxu0 0.0
    %630 = vmatpush1.msra.mxu0 %v215
    %631 = vmatprep.subr.mxu0 0.0
    %632 = vmatpush1.msra.mxu0 %v216
    %633 = vmatprep.subr.mxu0 0.0
    %634 = vmatpush1.msra.mxu0 %v217
    %635 = vmatprep.subr.mxu0 0.0
    %636 = vmatpush1.msra.mxu0 %v218
    %637 = vmatprep.subr.mxu0 0.0
    %638 = vmatpush1.msra.mxu0 %v219
    %639 = vmatprep.subr.mxu0 0.0
    %640 = vmatpush1.msra.mxu0 %v220
    %641 = vmatprep.subr.mxu0 0.0
    %642 = vmatpush1.msra.mxu0 %v221
    %643 = vmatprep.subr.mxu0 0.0
    %644 = vmatpush1.msra.mxu0 %v222
    %645 = vmatprep.subr.mxu0 0.0
    %646 = vmatpush1.msra.mxu0 %v223
    %647 = vmatprep.subr.mxu0 0.0
    %648 = vmatpush1.msra.mxu0 %v224
    %649 = vmatprep.subr.mxu0 0.0
    %650 = vmatpush1.msra.mxu0 %v225
    %651 = vmatprep.subr.mxu0 0.0
    %652 = vmatpush1.msra.mxu0 %v226
    %653 = vmatprep.subr.mxu0 0.0
    %654 = vmatpush1.msra.mxu0 %v227
    %655 = vmatprep.subr.mxu0 0.0
    %656 = vmatpush1.msra.mxu0 %v228
    %657 = vmatprep.subr.mxu0 0.0
    %658 = vmatpush1.msra.mxu0 %v229
    %659 = vmatprep.subr.mxu0 0.0
    %660 = vmatpush1.msra.mxu0 %v230
    %661 = vmatprep.subr.mxu0 0.0
    %662 = vmatpush1.msra.mxu0 %v231
    %663 = vmatprep.subr.mxu0 0.0
    %664 = vmatpush1.msra.mxu0 %v232
    %665 = vmatprep.subr.mxu0 0.0
    %666 = vmatpush1.msra.mxu0 %v233
    %667 = vmatprep.subr.mxu0 0.0
    %668 = vmatpush1.msra.mxu0 %v234
    %669 = vmatprep.subr.mxu0 0.0
    %670 = vmatpush1.msra.mxu0 %v235
    %671 = vmatprep.subr.mxu0 0.0
    %672 = vmatpush1.msra.mxu0 %v236
    %673 = vmatprep.subr.mxu0 0.0
    %674 = vmatpush1.msra.mxu0 %v237
    %675 = vmatprep.subr.mxu0 0.0
    %676 = vmatpush1.msra.mxu0 %v238
    %677 = vmatprep.subr.mxu0 0.0
    %678 = vmatpush1.msra.mxu0 %v239
    %679 = vmatprep.subr.mxu0 0.0
    %680 = vmatpush1.msra.mxu0 %v240
    %681 = vmatprep.subr.mxu0 0.0
    %682 = vmatpush1.msra.mxu0 %v241
    %683 = vmatprep.subr.mxu0 0.0
    %684 = vmatpush1.msra.mxu0 %v242
    %685 = vmatprep.subr.mxu0 0.0
    %686 = vmatpush1.msra.mxu0 %v243
    %687 = vmatprep.mubr.f32.mxu0 %v144
    %688 = vmatmul.mubr.f32.gmra.mrb[0].mxu0 %v143
    %v689 = vpop.f32.mrb[0].mxu0
    %v690 = vadd.f32 %v620, %v689
    %v691 = vpop.f32.mrb[0].mxu0
    %692 = vdwg.mxu0
    %vm693 = vcmask 80896
    %v695 = vsel %vm693, %v476, 0
    %vm697 = vcmask 1041408
    %v699 = vsel %vm697, %v293, 0
    %701 = vmatprep.subr.mxu0 0.0
    %702 = vmatpush1.msra.mxu0 %v292
    %703 = vmatprep.subr.mxu0 0.0
    %704 = vmatpush1.msra.mxu0 %v699
    %705 = vmatprep.subr.mxu0 0.0
    %706 = vmatpush1.msra.mxu0 0.0
    %707 = vmatprep.subr.mxu0 0.0
    %708 = vmatpush1.msra.mxu0 0.0
    %709 = vmatprep.subr.mxu0 0.0
    %710 = vmatpush1.msra.mxu0 0.0
    %711 = vmatprep.subr.mxu0 0.0
    %712 = vmatpush1.msra.mxu0 0.0
    %713 = vmatprep.subr.mxu0 0.0
    %714 = vmatpush1.msra.mxu0 0.0
    %715 = vmatprep.subr.mxu0 0.0
    %716 = vmatpush1.msra.mxu0 0.0
    %717 = vmatprep.subr.mxu0 0.0
    %718 = vmatpush1.msra.mxu0 0.0
    %719 = vmatprep.subr.mxu0 0.0
    %720 = vmatpush1.msra.mxu0 0.0
    %721 = vmatprep.subr.mxu0 0.0
    %722 = vmatpush1.msra.mxu0 0.0
    %723 = vmatprep.subr.mxu0 0.0
    %724 = vmatpush1.msra.mxu0 0.0
    %725 = vmatprep.subr.mxu0 0.0
    %726 = vmatpush1.msra.mxu0 0.0
    %727 = vmatprep.subr.mxu0 0.0
    %728 = vmatpush1.msra.mxu0 0.0
    %729 = vmatprep.subr.mxu0 0.0
    %730 = vmatpush1.msra.mxu0 0.0
    %731 = vmatprep.subr.mxu0 0.0
    %732 = vmatpush1.msra.mxu0 0.0
    %733 = vmatprep.subr.mxu0 0.0
    %734 = vmatpush1.msra.mxu0 0.0
    %735 = vmatprep.subr.mxu0 0.0
    %736 = vmatpush1.msra.mxu0 0.0
    %737 = vmatprep.subr.mxu0 0.0
    %738 = vmatpush1.msra.mxu0 0.0
    %739 = vmatprep.subr.mxu0 0.0
    %740 = vmatpush1.msra.mxu0 0.0
    %741 = vmatprep.subr.mxu0 0.0
    %742 = vmatpush1.msra.mxu0 0.0
    %743 = vmatprep.subr.mxu0 0.0
    %744 = vmatpush1.msra.mxu0 0.0
    %745 = vmatprep.subr.mxu0 0.0
    %746 = vmatpush1.msra.mxu0 0.0
    %747 = vmatprep.subr.mxu0 0.0
    %748 = vmatpush1.msra.mxu0 0.0
    %749 = vmatprep.subr.mxu0 0.0
    %750 = vmatpush1.msra.mxu0 0.0
    %751 = vmatprep.subr.mxu0 0.0
    %752 = vmatpush1.msra.mxu0 0.0
    %753 = vmatprep.subr.mxu0 0.0
    %754 = vmatpush1.msra.mxu0 0.0
    %755 = vmatprep.subr.mxu0 0.0
    %756 = vmatpush1.msra.mxu0 0.0
    %757 = vmatprep.subr.mxu0 0.0
    %758 = vmatpush1.msra.mxu0 0.0
    %759 = vmatprep.subr.mxu0 0.0
    %760 = vmatpush1.msra.mxu0 0.0
    %761 = vmatprep.subr.mxu0 0.0
    %762 = vmatpush1.msra.mxu0 0.0
    %763 = vmatprep.subr.mxu0 0.0
    %764 = vmatpush1.msra.mxu0 0.0
    %765 = vmatprep.mubr.f32.mxu0 0.0
    %766 = vmatmul.mubr.f32.gmra.mrb[0].mxu0 %v695
    %v767 = vpop.f32.mrb[0].mxu0
    %v768 = vadd.f32 0.0, %v767
    %v769 = vpop.f32.mrb[0].mxu0
    %770 = vdwg.mxu0
    %vm771 = vcmask 523264
    %v773 = vsel %vm771, %v690, 0
    %775 = vmatprep.subr.mxu0 0.0
    %776 = vmatpush1.msra.mxu0 %v284
    %777 = vmatprep.subr.mxu0 0.0
    %778 = vmatpush1.msra.mxu0 %v285
    %779 = vmatprep.subr.mxu0 0.0
    %780 = vmatpush1.msra.mxu0 %v286
    %781 = vmatprep.subr.mxu0 0.0
    %782 = vmatpush1.msra.mxu0 %v287
    %783 = vmatprep.subr.mxu0 0.0
    %784 = vmatpush1.msra.mxu0 %v288
    %785 = vmatprep.subr.mxu0 0.0
    %786 = vmatpush1.msra.mxu0 %v289
    %787 = vmatprep.subr.mxu0 0.0
    %788 = vmatpush1.msra.mxu0 %v290
    %789 = vmatprep.subr.mxu0 0.0
    %790 = vmatpush1.msra.mxu0 %v291
    %791 = vmatprep.subr.mxu0 0.0
    %792 = vmatpush1.msra.mxu0 0.0
    %793 = vmatprep.subr.mxu0 0.0
    %794 = vmatpush1.msra.mxu0 0.0
    %795 = vmatprep.subr.mxu0 0.0
    %796 = vmatpush1.msra.mxu0 0.0
    %797 = vmatprep.subr.mxu0 0.0
    %798 = vmatpush1.msra.mxu0 0.0
    %799 = vmatprep.subr.mxu0 0.0
    %800 = vmatpush1.msra.mxu0 0.0
    %801 = vmatprep.subr.mxu0 0.0
    %802 = vmatpush1.msra.mxu0 0.0
    %803 = vmatprep.subr.mxu0 0.0
    %804 = vmatpush1.msra.mxu0 0.0
    %805 = vmatprep.subr.mxu0 0.0
    %806 = vmatpush1.msra.mxu0 0.0
    %807 = vmatprep.subr.mxu0 0.0
    %808 = vmatpush1.msra.mxu0 0.0
    %809 = vmatprep.subr.mxu0 0.0
    %810 = vmatpush1.msra.mxu0 0.0
    %811 = vmatprep.subr.mxu0 0.0
    %812 = vmatpush1.msra.mxu0 0.0
    %813 = vmatprep.subr.mxu0 0.0
    %814 = vmatpush1.msra.mxu0 0.0
    %815 = vmatprep.subr.mxu0 0.0
    %816 = vmatpush1.msra.mxu0 0.0
    %817 = vmatprep.subr.mxu0 0.0
    %818 = vmatpush1.msra.mxu0 0.0
    %819 = vmatprep.subr.mxu0 0.0
    %820 = vmatpush1.msra.mxu0 0.0
    %821 = vmatprep.subr.mxu0 0.0
    %822 = vmatpush1.msra.mxu0 0.0
    %823 = vmatprep.subr.mxu0 0.0
    %824 = vmatpush1.msra.mxu0 0.0
    %825 = vmatprep.subr.mxu0 0.0
    %826 = vmatpush1.msra.mxu0 0.0
    %827 = vmatprep.subr.mxu0 0.0
    %828 = vmatpush1.msra.mxu0 0.0
    %829 = vmatprep.subr.mxu0 0.0
    %830 = vmatpush1.msra.mxu0 0.0
    %831 = vmatprep.subr.mxu0 0.0
    %832 = vmatpush1.msra.mxu0 0.0
    %833 = vmatprep.subr.mxu0 0.0
    %834 = vmatpush1.msra.mxu0 0.0
    %835 = vmatprep.subr.mxu0 0.0
    %836 = vmatpush1.msra.mxu0 0.0
    %837 = vmatprep.subr.mxu0 0.0
    %838 = vmatpush1.msra.mxu0 0.0
    %839 = vmatprep.mubr.f32.mxu0 0.0
    %840 = vmatmul.mubr.f32.gmra.mrb[0].mxu0 %v773
    %v841 = vpop.f32.mrb[0].mxu0
    %v842 = vadd.f32 %v768, %v841
    %v843 = vpop.f32.mrb[0].mxu0
    %844 = vdwg.mxu0
    %v846 = vlaneseq
    %v847 = vshrl.u32 %v846, 7
    %v848 = vsub.s32 0, %v847
    %v849 = vrot.slane %v294, %v848
    %v851 = vadd.f32 %v842, %v849
    %v853 = vlaneseq
    %v854 = vshrl.u32 %v853, 7
    %v855 = vsub.s32 0, %v854
    %v856 = vrot.slane %v303, %v855
    %v859 = vsel %vm771, %v851, 0
    %861 = vmatprep.subr.mxu0 0.0
    %862 = vmatpush1.msra.mxu0 %v295
    %863 = vmatprep.subr.mxu0 0.0
    %864 = vmatpush1.msra.mxu0 %v296
    %865 = vmatprep.subr.mxu0 0.0
    %866 = vmatpush1.msra.mxu0 %v297
    %867 = vmatprep.subr.mxu0 0.0
    %868 = vmatpush1.msra.mxu0 %v298
    %869 = vmatprep.subr.mxu0 0.0
    %870 = vmatpush1.msra.mxu0 %v299
    %871 = vmatprep.subr.mxu0 0.0
    %872 = vmatpush1.msra.mxu0 %v300
    %873 = vmatprep.subr.mxu0 0.0
    %874 = vmatpush1.msra.mxu0 %v301
    %875 = vmatprep.subr.mxu0 0.0
    %876 = vmatpush1.msra.mxu0 %v302
    %877 = vmatprep.subr.mxu0 0.0
    %878 = vmatpush1.msra.mxu0 0.0
    %879 = vmatprep.subr.mxu0 0.0
    %880 = vmatpush1.msra.mxu0 0.0
    %881 = vmatprep.subr.mxu0 0.0
    %882 = vmatpush1.msra.mxu0 0.0
    %883 = vmatprep.subr.mxu0 0.0
    %884 = vmatpush1.msra.mxu0 0.0
    %885 = vmatprep.subr.mxu0 0.0
    %886 = vmatpush1.msra.mxu0 0.0
    %887 = vmatprep.subr.mxu0 0.0
    %888 = vmatpush1.msra.mxu0 0.0
    %889 = vmatprep.subr.mxu0 0.0
    %890 = vmatpush1.msra.mxu0 0.0
    %891 = vmatprep.subr.mxu0 0.0
    %892 = vmatpush1.msra.mxu0 0.0
    %893 = vmatprep.subr.mxu0 0.0
    %894 = vmatpush1.msra.mxu0 0.0
    %895 = vmatprep.subr.mxu0 0.0
    %896 = vmatpush1.msra.mxu0 0.0
    %897 = vmatprep.subr.mxu0 0.0
    %898 = vmatpush1.msra.mxu0 0.0
    %899 = vmatprep.subr.mxu0 0.0
    %900 = vmatpush1.msra.mxu0 0.0
    %901 = vmatprep.subr.mxu0 0.0
    %902 = vmatpush1.msra.mxu0 0.0
    %903 = vmatprep.subr.mxu0 0.0
    %904 = vmatpush1.msra.mxu0 0.0
    %905 = vmatprep.subr.mxu0 0.0
    %906 = vmatpush1.msra.mxu0 0.0
    %907 = vmatprep.subr.mxu0 0.0
    %908 = vmatpush1.msra.mxu0 0.0
    %909 = vmatprep.subr.mxu0 0.0
    %910 = vmatpush1.msra.mxu0 0.0
    %911 = vmatprep.subr.mxu0 0.0
    %912 = vmatpush1.msra.mxu0 0.0
    %913 = vmatprep.subr.mxu0 0.0
    %914 = vmatpush1.msra.mxu0 0.0
    %915 = vmatprep.subr.mxu0 0.0
    %916 = vmatpush1.msra.mxu0 0.0
    %917 = vmatprep.subr.mxu0 0.0
    %918 = vmatpush1.msra.mxu0 0.0
    %919 = vmatprep.subr.mxu0 0.0
    %920 = vmatpush1.msra.mxu0 0.0
    %921 = vmatprep.subr.mxu0 0.0
    %922 = vmatpush1.msra.mxu0 0.0
    %923 = vmatprep.subr.mxu0 0.0
    %924 = vmatpush1.msra.mxu0 0.0
    %925 = vmatprep.mubr.f32.mxu0 0.0
    %926 = vmatmul.mubr.f32.gmra.mrb[0].mxu0 %v859
    %v927 = vpop.f32.mrb[0].mxu0
    %v928 = vadd.f32 %v856, %v927
    %v929 = vpop.f32.mrb[0].mxu0
    %930 = vdwg.mxu0
    %v931 = vmax.f32 %v928, 0.0
    %v933 = vlaneseq
    %v934 = vshrl.u32 %v933, 7
    %v935 = vsub.s32 0, %v934
    %v936 = vrot.slane %v308, %v935
    %vm938 = vcmask 261120
    %v940 = vsel %vm938, %v931, 0
    %942 = vmatprep.subr.mxu0 0.0
    %943 = vmatpush1.msra.mxu0 %v304
    %944 = vmatprep.subr.mxu0 0.0
    %945 = vmatpush1.msra.mxu0 %v305
    %946 = vmatprep.subr.mxu0 0.0
    %947 = vmatpush1.msra.mxu0 %v306
    %948 = vmatprep.subr.mxu0 0.0
    %949 = vmatpush1.msra.mxu0 %v307
    %950 = vmatprep.subr.mxu0 0.0
    %951 = vmatpush1.msra.mxu0 0.0
    %952 = vmatprep.subr.mxu0 0.0
    %953 = vmatpush1.msra.mxu0 0.0
    %954 = vmatprep.subr.mxu0 0.0
    %955 = vmatpush1.msra.mxu0 0.0
    %956 = vmatprep.subr.mxu0 0.0
    %957 = vmatpush1.msra.mxu0 0.0
    %958 = vmatprep.subr.mxu0 0.0
    %959 = vmatpush1.msra.mxu0 0.0
    %960 = vmatprep.subr.mxu0 0.0
    %961 = vmatpush1.msra.mxu0 0.0
    %962 = vmatprep.subr.mxu0 0.0
    %963 = vmatpush1.msra.mxu0 0.0
    %964 = vmatprep.subr.mxu0 0.0
    %965 = vmatpush1.msra.mxu0 0.0
    %966 = vmatprep.subr.mxu0 0.0
    %967 = vmatpush1.msra.mxu0 0.0
    %968 = vmatprep.subr.mxu0 0.0
    %969 = vmatpush1.msra.mxu0 0.0
    %970 = vmatprep.subr.mxu0 0.0
    %971 = vmatpush1.msra.mxu0 0.0
    %972 = vmatprep.subr.mxu0 0.0
    %973 = vmatpush1.msra.mxu0 0.0
    %974 = vmatprep.subr.mxu0 0.0
    %975 = vmatpush1.msra.mxu0 0.0
    %976 = vmatprep.subr.mxu0 0.0
    %977 = vmatpush1.msra.mxu0 0.0
    %978 = vmatprep.subr.mxu0 0.0
    %979 = vmatpush1.msra.mxu0 0.0
    %980 = vmatprep.subr.mxu0 0.0
    %981 = vmatpush1.msra.mxu0 0.0
    %982 = vmatprep.subr.mxu0 0.0
    %983 = vmatpush1.msra.mxu0 0.0
    %984 = vmatprep.subr.mxu0 0.0
    %985 = vmatpush1.msra.mxu0 0.0
    %986 = vmatprep.subr.mxu0 0.0
    %987 = vmatpush1.msra.mxu0 0.0
    %988 = vmatprep.subr.mxu0 0.0
    %989 = vmatpush1.msra.mxu0 0.0
    %990 = vmatprep.subr.mxu0 0.0
    %991 = vmatpush1.msra.mxu0 0.0
    %992 = vmatprep.subr.mxu0 0.0
    %993 = vmatpush1.msra.mxu0 0.0
    %994 = vmatprep.subr.mxu0 0.0
    %995 = vmatpush1.msra.mxu0 0.0
    %996 = vmatprep.subr.mxu0 0.0
    %997 = vmatpush1.msra.mxu0 0.0
    %998 = vmatprep.subr.mxu0 0.0
    %999 = vmatpush1.msra.mxu0 0.0
    %1000 = vmatprep.subr.mxu0 0.0
    %1001 = vmatpush1.msra.mxu0 0.0
    %1002 = vmatprep.subr.mxu0 0.0
    %1003 = vmatpush1.msra.mxu0 0.0
    %1004 = vmatprep.subr.mxu0 0.0
    %1005 = vmatpush1.msra.mxu0 0.0
    %1006 = vmatprep.mubr.f32.mxu0 0.0
    %1007 = vmatmul.mubr.f32.gmra.mrb[0].mxu0 %v940
    %v1008 = vpop.f32.mrb[0].mxu0
    %v1009 = vadd.f32 %v936, %v1008
    %v1010 = vpop.f32.mrb[0].mxu0
    %1011 = vdwg.mxu0
    %v1012 = vmax.f32 %v1009, 0.0
    %v1014 = vlaneseq
    %v1015 = vshrl.u32 %v1014, 7
    %v1016 = vsub.s32 0, %v1015
    %v1017 = vrot.slane %v321, %v1016
    %vm1019 = vcmask 785408
    %v1021 = vsel %vm1019, %v1012, 0
    %1023 = vmatprep.subr.mxu0 0.0
    %1024 = vmatpush1.msra.mxu0 %v309
    %1025 = vmatprep.subr.mxu0 0.0
    %1026 = vmatpush1.msra.mxu0 %v310
    %1027 = vmatprep.subr.mxu0 0.0
    %1028 = vmatpush1.msra.mxu0 %v311
    %1029 = vmatprep.subr.mxu0 0.0
    %1030 = vmatpush1.msra.mxu0 %v312
    %1031 = vmatprep.subr.mxu0 0.0
    %1032 = vmatpush1.msra.mxu0 %v313
    %1033 = vmatprep.subr.mxu0 0.0
    %1034 = vmatpush1.msra.mxu0 %v314
    %1035 = vmatprep.subr.mxu0 0.0
    %1036 = vmatpush1.msra.mxu0 %v315
    %1037 = vmatprep.subr.mxu0 0.0
    %1038 = vmatpush1.msra.mxu0 %v316
    %1039 = vmatprep.subr.mxu0 0.0
    %1040 = vmatpush1.msra.mxu0 %v317
    %1041 = vmatprep.subr.mxu0 0.0
    %1042 = vmatpush1.msra.mxu0 %v318
    %1043 = vmatprep.subr.mxu0 0.0
    %1044 = vmatpush1.msra.mxu0 %v319
    %1045 = vmatprep.subr.mxu0 0.0
    %1046 = vmatpush1.msra.mxu0 %v320
    %1047 = vmatprep.subr.mxu0 0.0
    %1048 = vmatpush1.msra.mxu0 0.0
    %1049 = vmatprep.subr.mxu0 0.0
    %1050 = vmatpush1.msra.mxu0 0.0
    %1051 = vmatprep.subr.mxu0 0.0
    %1052 = vmatpush1.msra.mxu0 0.0
    %1053 = vmatprep.subr.mxu0 0.0
    %1054 = vmatpush1.msra.mxu0 0.0
    %1055 = vmatprep.subr.mxu0 0.0
    %1056 = vmatpush1.msra.mxu0 0.0
    %1057 = vmatprep.subr.mxu0 0.0
    %1058 = vmatpush1.msra.mxu0 0.0
    %1059 = vmatprep.subr.mxu0 0.0
    %1060 = vmatpush1.msra.mxu0 0.0
    %1061 = vmatprep.subr.mxu0 0.0
    %1062 = vmatpush1.msra.mxu0 0.0
    %1063 = vmatprep.subr.mxu0 0.0
    %1064 = vmatpush1.msra.mxu0 0.0
    %1065 = vmatprep.subr.mxu0 0.0
    %1066 = vmatpush1.msra.mxu0 0.0
    %1067 = vmatprep.subr.mxu0 0.0
    %1068 = vmatpush1.msra.mxu0 0.0
    %1069 = vmatprep.subr.mxu0 0.0
    %1070 = vmatpush1.msra.mxu0 0.0
    %1071 = vmatprep.subr.mxu0 0.0
    %1072 = vmatpush1.msra.mxu0 0.0
    %1073 = vmatprep.subr.mxu0 0.0
    %1074 = vmatpush1.msra.mxu0 0.0
    %1075 = vmatprep.subr.mxu0 0.0
    %1076 = vmatpush1.msra.mxu0 0.0
    %1077 = vmatprep.subr.mxu0 0.0
    %1078 = vmatpush1.msra.mxu0 0.0
    %1079 = vmatprep.subr.mxu0 0.0
    %1080 = vmatpush1.msra.mxu0 0.0
    %1081 = vmatprep.subr.mxu0 0.0
    %1082 = vmatpush1.msra.mxu0 0.0
    %1083 = vmatprep.subr.mxu0 0.0
    %1084 = vmatpush1.msra.mxu0 0.0
    %1085 = vmatprep.subr.mxu0 0.0
    %1086 = vmatpush1.msra.mxu0 0.0
    %1087 = vmatprep.mubr.f32.mxu0 0.0
    %1088 = vmatmul.mubr.f32.gmra.mrb[0].mxu0 %v1021
    %v1089 = vpop.f32.mrb[0].mxu0
    %v1090 = vadd.f32 %v1017, %v1089
    %v1091 = vpop.f32.mrb[0].mxu0
    %1092 = vdwg.mxu0
    %v1093 = vlaneseq
    %v1094 = vand.u32 %v1093, 127
    %vm1095 = vcmp.ge.s32.totalorder %v1094, 0
    %vm1096 = vcmp.lt.s32.totalorder %v1094, 10
    %vm1097 = vmand %vm1095, %vm1096
    %v1098 = vsel %vm1097, %v1090, -1e+30
    %1099 = vmax.xlane.f32.xlu0 %v1098
    %v1100 = vpop.xlane.xlu0 %1099
    %v1101 = vsub.f32 %v1090, %v1100
    %v1102 = vmul.f32 %v1101, 1.442695
    %v1103 = vpow.pop %v1102
    %v1104 = vsel %vm1097, %v1103, 0.0
    %1105 = vadd.xlane.f32.xlu0 %v1104
    %v1106 = vpop.xlane.xlu0 %1105
    %v1107 = vrcp.pop %v1106
    %v1108 = vmul.f32 %v1104, %v1107
    %v1109 = vadd.f32 %v1108, 0.0
    %vm1110 = vcmp.ge.s32.totalorder %v1094, 10
    %vm1111 = vcmp.lt.s32.totalorder %v1094, 14
    %vm1112 = vmand %vm1110, %vm1111
    %v1113 = vsel %vm1112, %v1090, -1e+30
    %1114 = vmax.xlane.f32.xlu0 %v1113
    %v1115 = vpop.xlane.xlu0 %1114
    %v1116 = vsub.f32 %v1090, %v1115
    %v1117 = vmul.f32 %v1116, 1.442695
    %v1118 = vpow.pop %v1117
    %v1119 = vsel %vm1112, %v1118, 0.0
    %1120 = vadd.xlane.f32.xlu0 %v1119
    %v1121 = vpop.xlane.xlu0 %1120
    %v1122 = vrcp.pop %v1121
    %v1123 = vmul.f32 %v1119, %v1122
    %v1124 = vadd.f32 %v1109, %v1123
    %vm1125 = vcmp.ge.s32.totalorder %v1094, 14
    %vm1126 = vcmp.lt.s32.totalorder %v1094, 16
    %vm1127 = vmand %vm1125, %vm1126
    %v1128 = vsel %vm1127, %v1090, -1e+30
    %1129 = vmax.xlane.f32.xlu0 %v1128
    %v1130 = vpop.xlane.xlu0 %1129
    %v1131 = vsub.f32 %v1090, %v1130
    %v1132 = vmul.f32 %v1131, 1.442695
    %v1133 = vpow.pop %v1132
    %v1134 = vsel %vm1127, %v1133, 0.0
    %1135 = vadd.xlane.f32.xlu0 %v1134
    %v1136 = vpop.xlane.xlu0 %1135
    %v1137 = vrcp.pop %v1136
    %v1138 = vmul.f32 %v1134, %v1137
    %v1139 = vadd.f32 %v1124, %v1138
    %1140 = vst [vmem:[%s15] sm:$0xff] %v1139
    // Predicated region
    $region90: #{_forward_impl.1} parent=1 // pred_check
      _
    $region91: #{_forward_impl.1} parent=1 // pred_check_branch
      %1142 = sbr.rel (0) target = $region93
    $region92: #{_forward_impl.1} parent=1 // pred_region
      _
    $region93: #{_forward_impl.1} parent=1 // pred_fallthru
      _
    // Predicated region
    $region94: #{_forward_impl.1} parent=1 // pred_check
      _
    $region95: #{_forward_impl.1} parent=1 // pred_check_branch
      %1144 = sbr.rel (0) target = $region97
    $region96: #{_forward_impl.1} parent=1 // pred_region
      _
    $region97: #{_forward_impl.1} parent=1 // pred_fallthru
      _
    %1145 = vsyncpa [#allocation3], 1
    %1146 = vsyncpa [#allocation5], 1
    %1147 = vsyncpa [#allocation8], 1
    %1148 = vsyncpa [#allocation11], 1

</llo_original>
